<compile_context>
chip_gen: v5e
topology: v5e:2x2
jax: 0.10.0
libtpu: 0.0.40
codegen_flags: <defaults>
</compile_context>

<pallas_src>
import jax
import jax.numpy as jnp
from jax.experimental import pallas as pl
from jax.experimental.pallas import tpu as pltpu


# ------------------------------ fused kernel ---------------------------------
def make_fused_lstm_kernel(num_layers):
    """Kernel ref order: x_tmaj, (w_ih_T, w_hh_T, b)*num_layers, w_fc, b_fc, out.

    x_tmaj : (T*B, D)   f32, t-major rows (row = t*B + b)
    w_ih_T : (D_in, 4H) bf16
    w_hh_T : (H, 4H)    bf16
    b      : (1, 4H)    f32   (b_ih + b_hh)
    w_fc   : (T, H, C)  bf16  (fc_w.T reshaped per timestep)
    b_fc   : (1, C)     f32
    out    : (B, C)     f32
    """

    def kernel(*refs):
        x_ref = refs[0]
        wfc_ref = refs[1 + 3 * num_layers]
        bfc_ref = refs[2 + 3 * num_layers]
        o_ref = refs[3 + 3 * num_layers]

        B, C = o_ref.shape
        T, H, _ = wfc_ref.shape

        # Weights already transposed + bf16 (prepared once outside the jit).
        wih = [refs[1 + 3 * l][...] for l in range(num_layers)]   # (D_in, 4H)
        whh = [refs[2 + 3 * l][...] for l in range(num_layers)]   # (H,    4H)
        # Hoist bias broadcasts out of the unrolled loops.
        bias = [jnp.broadcast_to(refs[3 + 3 * l][...], (B, 4 * H))
                for l in range(num_layers)]

        # ---- layer-0 input projection for ALL timesteps: one MXU matmul,
        #      hoisted off the serial critical path.  Rows stay t-major. ----
        x_bf = x_ref[...].astype(jnp.bfloat16)
        gx0 = jnp.dot(x_bf, wih[0],
                      preferred_element_type=jnp.float32)          # (T*B, 4H)

        # Recurrent state: c in f32 (elementwise path); h in bf16 (it is only
        # ever a matmul operand).
        h = [jnp.zeros((B, H), jnp.bfloat16) for _ in range(num_layers)]
        c = [jnp.zeros((B, H), jnp.float32) for _ in range(num_layers)]
        acc = jnp.zeros((B, C), jnp.float32)

        for t in range(T):                           # statically unrolled
            x_t = None
            for l in range(num_layers):
                if l == 0:
                    gin = gx0[t * B:(t + 1) * B, :]  # static sublane slice
                else:
                    # Depends only on this timestep's lower-layer h, so it does
                    # not extend the lower layer's recurrent chain.
                    gin = jnp.dot(x_t, wih[l],
                                  preferred_element_type=jnp.float32)
                gates = gin + bias[l] + jnp.dot(
                    h[l], whh[l],
                    preferred_element_type=jnp.float32)            # (B, 4H) f32
                # Two full-vreg EUP pushes; slices feed only VPU multiplies.
                sg = jax.nn.sigmoid(gates)
                th = jnp.tanh(gates)
                i_g = sg[:, 0 * H:1 * H]
                f_g = sg[:, 1 * H:2 * H]
                g_g = th[:, 2 * H:3 * H]
                o_g = sg[:, 3 * H:4 * H]
                c[l] = f_g * c[l] + i_g * g_g
                h[l] = (o_g * jnp.tanh(c[l])).astype(jnp.bfloat16)
                x_t = h[l]
            # ---- fused FC head: per-timestep accumulation, equivalent to
            #      out.reshape(B, T*H) @ fc_w.T ----
            acc = acc + jnp.dot(x_t, wfc_ref[t],
                                preferred_element_type=jnp.float32)

        o_ref[...] = acc + bfc_ref[...]

    return kernel


# ------------------------- one-time weight preparation ------------------------
def prepare_params(params, seq_len):
    """Transpose / combine / bf16-cast weights once, OUTSIDE the jitted call."""
    prep = {"lstm": []}
    for layer in params["lstm"]:
        prep["lstm"].append({
            "w_ih_t": layer["w_ih"].T.astype(jnp.bfloat16),            # (D_in, 4H)
            "w_hh_t": layer["w_hh"].T.astype(jnp.bfloat16),            # (H, 4H)
            "b": (layer["b_ih"] + layer["b_hh"])[None, :].astype(jnp.float32),
        })
    hidden = params["lstm"][-1]["w_hh"].shape[1]
    num_classes = params["fc_w"].shape[0]
    prep["fc_w_t"] = params["fc_w"].T.reshape(
        seq_len, hidden, num_classes).astype(jnp.bfloat16)             # (T, H, C)
    prep["fc_b"] = params["fc_b"][None, :].astype(jnp.float32)         # (1, C)
    return prep


# --------------------------------- wrapper ------------------------------------
@jax.jit
def lstm_model(x, prep):
    """x: (B, T, D_in). Returns logits (B, num_classes)."""
    B, T, D = x.shape
    num_layers = len(prep["lstm"])
    num_classes = prep["fc_w_t"].shape[2]

    # t-major flatten (row = t*B + b) so the kernel never reshapes x.
    x_tmaj = jnp.swapaxes(x, 0, 1).reshape(T * B, D).astype(jnp.float32)

    args = [x_tmaj]
    for layer in prep["lstm"]:
        args += [layer["w_ih_t"], layer["w_hh_t"], layer["b"]]
    args += [prep["fc_w_t"], prep["fc_b"]]

    vmem_spec = pl.BlockSpec(memory_space=pltpu.MemorySpace.VMEM)
    return pl.pallas_call(
        make_fused_lstm_kernel(num_layers),
        out_shape=jax.ShapeDtypeStruct((B, num_classes), jnp.float32),
        in_specs=[vmem_spec] * len(args),
        out_specs=vmem_spec,
    )(*args)


# ------------------------------ pure-JAX reference -----------------------------
def lstm_model_ref(x, params):
    B, T, _ = x.shape
    h_btd = x
    for layer in params["lstm"]:
        w_ih, w_hh = layer["w_ih"], layer["w_hh"]
        b = layer["b_ih"] + layer["b_hh"]
        H = w_hh.shape[1]

        def step(carry, x_t, w_ih=w_ih, w_hh=w_hh, b=b):
            h, c = carry
            gates = x_t @ w_ih.T + h @ w_hh.T + b
            i, f, g, o = jnp.split(gates, 4, axis=-1)
            c = jax.nn.sigmoid(f) * c + jax.nn.sigmoid(i) * jnp.tanh(g)
            h = jax.nn.sigmoid(o) * jnp.tanh(c)
            return (h, c), h

        h0 = jnp.zeros((B, H), jnp.float32)
        c0 = jnp.zeros((B, H), jnp.float32)
        _, ys = jax.lax.scan(step, (h0, c0), jnp.swapaxes(h_btd, 0, 1))
        h_btd = jnp.swapaxes(ys, 0, 1)
    out_flat = h_btd.reshape(B, -1)
    return out_flat @ params["fc_w"].T + params["fc_b"]


# ----------------------------------- params ------------------------------------
def init_params(key, input_size, hidden_size, num_layers, num_classes, seq_len):
    k = 1.0 / jnp.sqrt(hidden_size)
    params = {"lstm": []}
    for layer in range(num_layers):
        d_in = input_size if layer == 0 else hidden_size
        key, k1, k2, k3, k4 = jax.random.split(key, 5)
        params["lstm"].append({
            "w_ih": jax.random.uniform(k1, (4 * hidden_size, d_in),
                                       jnp.float32, -k, k),
            "w_hh": jax.random.uniform(k2, (4 * hidden_size, hidden_size),
                                       jnp.float32, -k, k),
            "b_ih": jax.random.uniform(k3, (4 * hidden_size,),
                                       jnp.float32, -k, k),
            "b_hh": jax.random.uniform(k4, (4 * hidden_size,),
                                       jnp.float32, -k, k),
        })
    key, k5, k6 = jax.random.split(key, 3)
    kf = 1.0 / jnp.sqrt(hidden_size * seq_len)
    params["fc_w"] = jax.random.uniform(
        k5, (num_classes, hidden_size * seq_len), jnp.float32, -kf, kf)
    params["fc_b"] = jax.random.uniform(
        k6, (num_classes,), jnp.float32, -kf, kf)
    return params


if __name__ == "__main__":
    # Small shapes consistent with the module's forward pass.
    batch = 2
    seq_len = 8
    input_size = 16
    hidden_size = 32          # 4H = 128 -> the gate vector is one full vreg
    num_layers = 2
    num_classes = 10

    key = jax.random.PRNGKey(0)
    key, kx, kp = jax.random.split(key, 3)
    x = jax.random.normal(kx, (batch, seq_len, input_size), jnp.float32)
    params = init_params(kp, input_size, hidden_size, num_layers,
                         num_classes, seq_len)
    prep = prepare_params(params, seq_len)

    out = lstm_model(x, prep)
    out = jax.block_until_ready(out)

    ref = lstm_model_ref(x, params)
    assert out.shape == (batch, num_classes)
    # bf16 MXU operands (per perf review) -> looser tolerance than all-f32.
    assert jnp.allclose(out, ref, atol=5e-2, rtol=5e-2), "mismatch vs reference"

    print("KERNEL_OK")
</pallas_src>

<mosaic_0001>
module attributes {stable_mosaic.version = 11 : i64} {
  func.func @kernel(%arg0: memref<16x16xf32, #tpu.memory_space<vmem>>, %arg1: memref<16x128xbf16, #tpu.memory_space<vmem>>, %arg2: memref<32x128xbf16, #tpu.memory_space<vmem>>, %arg3: memref<1x128xf32, #tpu.memory_space<vmem>>, %arg4: memref<32x128xbf16, #tpu.memory_space<vmem>>, %arg5: memref<32x128xbf16, #tpu.memory_space<vmem>>, %arg6: memref<1x128xf32, #tpu.memory_space<vmem>>, %arg7: memref<8x32x10xbf16, #tpu.memory_space<vmem>>, %arg8: memref<1x10xf32, #tpu.memory_space<vmem>>, %arg9: memref<2x10xf32, #tpu.memory_space<vmem>>) attributes {dimension_semantics = [], scalar_prefetch = 0 : i64, scratch_operands = 0 : i64, tpu.core_type = #tpu.core_type<tc>} {
    %c0 = arith.constant 0 : index
    %c0_0 = arith.constant 0 : index
    %0 = vector.load %arg1[%c0, %c0_0] : memref<16x128xbf16, #tpu.memory_space<vmem>>, vector<16x128xbf16>
    %c0_1 = arith.constant 0 : index
    %c0_2 = arith.constant 0 : index
    %1 = vector.load %arg4[%c0_1, %c0_2] : memref<32x128xbf16, #tpu.memory_space<vmem>>, vector<32x128xbf16>
    %c0_3 = arith.constant 0 : index
    %c0_4 = arith.constant 0 : index
    %2 = vector.load %arg2[%c0_3, %c0_4] : memref<32x128xbf16, #tpu.memory_space<vmem>>, vector<32x128xbf16>
    %c0_5 = arith.constant 0 : index
    %c0_6 = arith.constant 0 : index
    %3 = vector.load %arg5[%c0_5, %c0_6] : memref<32x128xbf16, #tpu.memory_space<vmem>>, vector<32x128xbf16>
    %c0_7 = arith.constant 0 : index
    %c0_8 = arith.constant 0 : index
    %4 = vector.load %arg3[%c0_7, %c0_8] : memref<1x128xf32, #tpu.memory_space<vmem>>, vector<1x128xf32>
    %5 = vector.shape_cast %4 : vector<1x128xf32> to vector<1x128xf32>
    %6 = vector.broadcast %5 : vector<1x128xf32> to vector<2x128xf32>
    %c0_9 = arith.constant 0 : index
    %c0_10 = arith.constant 0 : index
    %7 = vector.load %arg6[%c0_9, %c0_10] : memref<1x128xf32, #tpu.memory_space<vmem>>, vector<1x128xf32>
    %8 = vector.shape_cast %7 : vector<1x128xf32> to vector<1x128xf32>
    %9 = vector.broadcast %8 : vector<1x128xf32> to vector<2x128xf32>
    %c0_11 = arith.constant 0 : index
    %c0_12 = arith.constant 0 : index
    %10 = vector.load %arg0[%c0_11, %c0_12] : memref<16x16xf32, #tpu.memory_space<vmem>>, vector<16x16xf32>
    %11 = arith.truncf %10 : vector<16x16xf32> to vector<16x16xbf16>
    %cst = arith.constant dense<0.000000e+00> : vector<16x128xf32>
    %12 = tpu.matmul %11, %0, %cst {dimension_numbers = #tpu.dot_dimension_numbers<[1], [0], [0], [1], [0, 0, 1, 1], [], []>} : vector<16x16xbf16>, vector<16x128xbf16>, vector<16x128xf32> -> vector<16x128xf32>
    %cst_13 = arith.constant 0.000000e+00 : bf16
    %13 = vector.broadcast %cst_13 : bf16 to vector<2x32xbf16>
    %cst_14 = arith.constant 0.000000e+00 : bf16
    %14 = vector.broadcast %cst_14 : bf16 to vector<2x32xbf16>
    %cst_15 = arith.constant 0.000000e+00 : f32
    %15 = vector.broadcast %cst_15 : f32 to vector<2x32xf32>
    %cst_16 = arith.constant 0.000000e+00 : f32
    %16 = vector.broadcast %cst_16 : f32 to vector<2x32xf32>
    %cst_17 = arith.constant 0.000000e+00 : f32
    %17 = vector.broadcast %cst_17 : f32 to vector<2x10xf32>
    %18 = vector.extract_strided_slice %12 {offsets = [0, 0], sizes = [2, 128], strides = [1, 1]} : vector<16x128xf32> to vector<2x128xf32>
    %19 = arith.addf %18, %6 : vector<2x128xf32>
    %cst_18 = arith.constant dense<0.000000e+00> : vector<2x128xf32>
    %20 = tpu.matmul %13, %2, %cst_18 {dimension_numbers = #tpu.dot_dimension_numbers<[1], [0], [0], [1], [0, 0, 1, 1], [], []>} : vector<2x32xbf16>, vector<32x128xbf16>, vector<2x128xf32> -> vector<2x128xf32>
    %21 = arith.addf %19, %20 : vector<2x128xf32>
    %22 = arith.negf %21 : vector<2x128xf32>
    %23 = math.exp %22 : vector<2x128xf32>
    %cst_19 = arith.constant 1.000000e+00 : f32
    %24 = vector.broadcast %cst_19 : f32 to vector<2x128xf32>
    %25 = arith.addf %24, %23 : vector<2x128xf32>
    %26 = arith.divf %24, %25 : vector<2x128xf32>
    %27 = math.tanh %21 : vector<2x128xf32>
    %28 = vector.extract_strided_slice %26 {offsets = [0, 0], sizes = [2, 32], strides = [1, 1]} : vector<2x128xf32> to vector<2x32xf32>
    %29 = vector.extract_strided_slice %26 {offsets = [0, 32], sizes = [2, 32], strides = [1, 1]} : vector<2x128xf32> to vector<2x32xf32>
    %30 = vector.extract_strided_slice %27 {offsets = [0, 64], sizes = [2, 32], strides = [1, 1]} : vector<2x128xf32> to vector<2x32xf32>
    %31 = vector.extract_strided_slice %26 {offsets = [0, 96], sizes = [2, 32], strides = [1, 1]} : vector<2x128xf32> to vector<2x32xf32>
    %32 = arith.mulf %29, %15 : vector<2x32xf32>
    %33 = arith.mulf %28, %30 : vector<2x32xf32>
    %34 = arith.addf %32, %33 : vector<2x32xf32>
    %35 = math.tanh %34 : vector<2x32xf32>
    %36 = arith.mulf %31, %35 : vector<2x32xf32>
    %37 = arith.truncf %36 : vector<2x32xf32> to vector<2x32xbf16>
    %cst_20 = arith.constant dense<0.000000e+00> : vector<2x128xf32>
    %38 = tpu.matmul %37, %1, %cst_20 {dimension_numbers = #tpu.dot_dimension_numbers<[1], [0], [0], [1], [0, 0, 1, 1], [], []>} : vector<2x32xbf16>, vector<32x128xbf16>, vector<2x128xf32> -> vector<2x128xf32>
    %39 = arith.addf %38, %9 : vector<2x128xf32>
    %cst_21 = arith.constant dense<0.000000e+00> : vector<2x128xf32>
    %40 = tpu.matmul %14, %3, %cst_21 {dimension_numbers = #tpu.dot_dimension_numbers<[1], [0], [0], [1], [0, 0, 1, 1], [], []>} : vector<2x32xbf16>, vector<32x128xbf16>, vector<2x128xf32> -> vector<2x128xf32>
    %41 = arith.addf %39, %40 : vector<2x128xf32>
    %42 = arith.negf %41 : vector<2x128xf32>
    %43 = math.exp %42 : vector<2x128xf32>
    %cst_22 = arith.constant 1.000000e+00 : f32
    %44 = vector.broadcast %cst_22 : f32 to vector<2x128xf32>
    %45 = arith.addf %44, %43 : vector<2x128xf32>
    %46 = arith.divf %44, %45 : vector<2x128xf32>
    %47 = math.tanh %41 : vector<2x128xf32>
    %48 = vector.extract_strided_slice %46 {offsets = [0, 0], sizes = [2, 32], strides = [1, 1]} : vector<2x128xf32> to vector<2x32xf32>
    %49 = vector.extract_strided_slice %46 {offsets = [0, 32], sizes = [2, 32], strides = [1, 1]} : vector<2x128xf32> to vector<2x32xf32>
    %50 = vector.extract_strided_slice %47 {offsets = [0, 64], sizes = [2, 32], strides = [1, 1]} : vector<2x128xf32> to vector<2x32xf32>
    %51 = vector.extract_strided_slice %46 {offsets = [0, 96], sizes = [2, 32], strides = [1, 1]} : vector<2x128xf32> to vector<2x32xf32>
    %52 = arith.mulf %49, %16 : vector<2x32xf32>
    %53 = arith.mulf %48, %50 : vector<2x32xf32>
    %54 = arith.addf %52, %53 : vector<2x32xf32>
    %55 = math.tanh %54 : vector<2x32xf32>
    %56 = arith.mulf %51, %55 : vector<2x32xf32>
    %57 = arith.truncf %56 : vector<2x32xf32> to vector<2x32xbf16>
    %c0_23 = arith.constant 0 : index
    %c0_24 = arith.constant 0 : index
    %c0_25 = arith.constant 0 : index
    %58 = vector.load %arg7[%c0_23, %c0_24, %c0_25] : memref<8x32x10xbf16, #tpu.memory_space<vmem>>, vector<1x32x10xbf16>
    %59 = vector.shape_cast %58 : vector<1x32x10xbf16> to vector<32x10xbf16>
    %cst_26 = arith.constant dense<0.000000e+00> : vector<2x10xf32>
    %60 = tpu.matmul %57, %59, %cst_26 {dimension_numbers = #tpu.dot_dimension_numbers<[1], [0], [0], [1], [0, 0, 1, 1], [], []>} : vector<2x32xbf16>, vector<32x10xbf16>, vector<2x10xf32> -> vector<2x10xf32>
    %61 = arith.addf %17, %60 : vector<2x10xf32>
    %62 = vector.extract_strided_slice %12 {offsets = [2, 0], sizes = [2, 128], strides = [1, 1]} : vector<16x128xf32> to vector<2x128xf32>
    %63 = arith.addf %62, %6 : vector<2x128xf32>
    %cst_27 = arith.constant dense<0.000000e+00> : vector<2x128xf32>
    %64 = tpu.matmul %37, %2, %cst_27 {dimension_numbers = #tpu.dot_dimension_numbers<[1], [0], [0], [1], [0, 0, 1, 1], [], []>} : vector<2x32xbf16>, vector<32x128xbf16>, vector<2x128xf32> -> vector<2x128xf32>
    %65 = arith.addf %63, %64 : vector<2x128xf32>
    %66 = arith.negf %65 : vector<2x128xf32>
    %67 = math.exp %66 : vector<2x128xf32>
    %cst_28 = arith.constant 1.000000e+00 : f32
    %68 = vector.broadcast %cst_28 : f32 to vector<2x128xf32>
    %69 = arith.addf %68, %67 : vector<2x128xf32>
    %70 = arith.divf %68, %69 : vector<2x128xf32>
    %71 = math.tanh %65 : vector<2x128xf32>
    %72 = vector.extract_strided_slice %70 {offsets = [0, 0], sizes = [2, 32], strides = [1, 1]} : vector<2x128xf32> to vector<2x32xf32>
    %73 = vector.extract_strided_slice %70 {offsets = [0, 32], sizes = [2, 32], strides = [1, 1]} : vector<2x128xf32> to vector<2x32xf32>
    %74 = vector.extract_strided_slice %71 {offsets = [0, 64], sizes = [2, 32], strides = [1, 1]} : vector<2x128xf32> to vector<2x32xf32>
    %75 = vector.extract_strided_slice %70 {offsets = [0, 96], sizes = [2, 32], strides = [1, 1]} : vector<2x128xf32> to vector<2x32xf32>
    %76 = arith.mulf %73, %34 : vector<2x32xf32>
    %77 = arith.mulf %72, %74 : vector<2x32xf32>
    %78 = arith.addf %76, %77 : vector<2x32xf32>
    %79 = math.tanh %78 : vector<2x32xf32>
    %80 = arith.mulf %75, %79 : vector<2x32xf32>
    %81 = arith.truncf %80 : vector<2x32xf32> to vector<2x32xbf16>
    %cst_29 = arith.constant dense<0.000000e+00> : vector<2x128xf32>
    %82 = tpu.matmul %81, %1, %cst_29 {dimension_numbers = #tpu.dot_dimension_numbers<[1], [0], [0], [1], [0, 0, 1, 1], [], []>} : vector<2x32xbf16>, vector<32x128xbf16>, vector<2x128xf32> -> vector<2x128xf32>
    %83 = arith.addf %82, %9 : vector<2x128xf32>
    %cst_30 = arith.constant dense<0.000000e+00> : vector<2x128xf32>
    %84 = tpu.matmul %57, %3, %cst_30 {dimension_numbers = #tpu.dot_dimension_numbers<[1], [0], [0], [1], [0, 0, 1, 1], [], []>} : vector<2x32xbf16>, vector<32x128xbf16>, vector<2x128xf32> -> vector<2x128xf32>
    %85 = arith.addf %83, %84 : vector<2x128xf32>
    %86 = arith.negf %85 : vector<2x128xf32>
    %87 = math.exp %86 : vector<2x128xf32>
    %cst_31 = arith.constant 1.000000e+00 : f32
    %88 = vector.broadcast %cst_31 : f32 to vector<2x128xf32>
    %89 = arith.addf %88, %87 : vector<2x128xf32>
    %90 = arith.divf %88, %89 : vector<2x128xf32>
    %91 = math.tanh %85 : vector<2x128xf32>
    %92 = vector.extract_strided_slice %90 {offsets = [0, 0], sizes = [2, 32], strides = [1, 1]} : vector<2x128xf32> to vector<2x32xf32>
    %93 = vector.extract_strided_slice %90 {offsets = [0, 32], sizes = [2, 32], strides = [1, 1]} : vector<2x128xf32> to vector<2x32xf32>
    %94 = vector.extract_strided_slice %91 {offsets = [0, 64], sizes = [2, 32], strides = [1, 1]} : vector<2x128xf32> to vector<2x32xf32>
    %95 = vector.extract_strided_slice %90 {offsets = [0, 96], sizes = [2, 32], strides = [1, 1]} : vector<2x128xf32> to vector<2x32xf32>
    %96 = arith.mulf %93, %54 : vector<2x32xf32>
    %97 = arith.mulf %92, %94 : vector<2x32xf32>
    %98 = arith.addf %96, %97 : vector<2x32xf32>
    %99 = math.tanh %98 : vector<2x32xf32>
    %100 = arith.mulf %95, %99 : vector<2x32xf32>
    %101 = arith.truncf %100 : vector<2x32xf32> to vector<2x32xbf16>
    %c1 = arith.constant 1 : index
    %c0_32 = arith.constant 0 : index
    %c0_33 = arith.constant 0 : index
    %102 = vector.load %arg7[%c1, %c0_32, %c0_33] : memref<8x32x10xbf16, #tpu.memory_space<vmem>>, vector<1x32x10xbf16>
    %103 = vector.shape_cast %102 : vector<1x32x10xbf16> to vector<32x10xbf16>
    %cst_34 = arith.constant dense<0.000000e+00> : vector<2x10xf32>
    %104 = tpu.matmul %101, %103, %cst_34 {dimension_numbers = #tpu.dot_dimension_numbers<[1], [0], [0], [1], [0, 0, 1, 1], [], []>} : vector<2x32xbf16>, vector<32x10xbf16>, vector<2x10xf32> -> vector<2x10xf32>
    %105 = arith.addf %61, %104 : vector<2x10xf32>
    %106 = vector.extract_strided_slice %12 {offsets = [4, 0], sizes = [2, 128], strides = [1, 1]} : vector<16x128xf32> to vector<2x128xf32>
    %107 = arith.addf %106, %6 : vector<2x128xf32>
    %cst_35 = arith.constant dense<0.000000e+00> : vector<2x128xf32>
    %108 = tpu.matmul %81, %2, %cst_35 {dimension_numbers = #tpu.dot_dimension_numbers<[1], [0], [0], [1], [0, 0, 1, 1], [], []>} : vector<2x32xbf16>, vector<32x128xbf16>, vector<2x128xf32> -> vector<2x128xf32>
    %109 = arith.addf %107, %108 : vector<2x128xf32>
    %110 = arith.negf %109 : vector<2x128xf32>
    %111 = math.exp %110 : vector<2x128xf32>
    %cst_36 = arith.constant 1.000000e+00 : f32
    %112 = vector.broadcast %cst_36 : f32 to vector<2x128xf32>
    %113 = arith.addf %112, %111 : vector<2x128xf32>
    %114 = arith.divf %112, %113 : vector<2x128xf32>
    %115 = math.tanh %109 : vector<2x128xf32>
    %116 = vector.extract_strided_slice %114 {offsets = [0, 0], sizes = [2, 32], strides = [1, 1]} : vector<2x128xf32> to vector<2x32xf32>
    %117 = vector.extract_strided_slice %114 {offsets = [0, 32], sizes = [2, 32], strides = [1, 1]} : vector<2x128xf32> to vector<2x32xf32>
    %118 = vector.extract_strided_slice %115 {offsets = [0, 64], sizes = [2, 32], strides = [1, 1]} : vector<2x128xf32> to vector<2x32xf32>
    %119 = vector.extract_strided_slice %114 {offsets = [0, 96], sizes = [2, 32], strides = [1, 1]} : vector<2x128xf32> to vector<2x32xf32>
    %120 = arith.mulf %117, %78 : vector<2x32xf32>
    %121 = arith.mulf %116, %118 : vector<2x32xf32>
    %122 = arith.addf %120, %121 : vector<2x32xf32>
    %123 = math.tanh %122 : vector<2x32xf32>
    %124 = arith.mulf %119, %123 : vector<2x32xf32>
    %125 = arith.truncf %124 : vector<2x32xf32> to vector<2x32xbf16>
    %cst_37 = arith.constant dense<0.000000e+00> : vector<2x128xf32>
    %126 = tpu.matmul %125, %1, %cst_37 {dimension_numbers = #tpu.dot_dimension_numbers<[1], [0], [0], [1], [0, 0, 1, 1], [], []>} : vector<2x32xbf16>, vector<32x128xbf16>, vector<2x128xf32> -> vector<2x128xf32>
    %127 = arith.addf %126, %9 : vector<2x128xf32>
    %cst_38 = arith.constant dense<0.000000e+00> : vector<2x128xf32>
    %128 = tpu.matmul %101, %3, %cst_38 {dimension_numbers = #tpu.dot_dimension_numbers<[1], [0], [0], [1], [0, 0, 1, 1], [], []>} : vector<2x32xbf16>, vector<32x128xbf16>, vector<2x128xf32> -> vector<2x128xf32>
    %129 = arith.addf %127, %128 : vector<2x128xf32>
    %130 = arith.negf %129 : vector<2x128xf32>
    %131 = math.exp %130 : vector<2x128xf32>
    %cst_39 = arith.constant 1.000000e+00 : f32
    %132 = vector.broadcast %cst_39 : f32 to vector<2x128xf32>
    %133 = arith.addf %132, %131 : vector<2x128xf32>
    %134 = arith.divf %132, %133 : vector<2x128xf32>
    %135 = math.tanh %129 : vector<2x128xf32>
    %136 = vector.extract_strided_slice %134 {offsets = [0, 0], sizes = [2, 32], strides = [1, 1]} : vector<2x128xf32> to vector<2x32xf32>
    %137 = vector.extract_strided_slice %134 {offsets = [0, 32], sizes = [2, 32], strides = [1, 1]} : vector<2x128xf32> to vector<2x32xf32>
    %138 = vector.extract_strided_slice %135 {offsets = [0, 64], sizes = [2, 32], strides = [1, 1]} : vector<2x128xf32> to vector<2x32xf32>
    %139 = vector.extract_strided_slice %134 {offsets = [0, 96], sizes = [2, 32], strides = [1, 1]} : vector<2x128xf32> to vector<2x32xf32>
    %140 = arith.mulf %137, %98 : vector<2x32xf32>
    %141 = arith.mulf %136, %138 : vector<2x32xf32>
    %142 = arith.addf %140, %141 : vector<2x32xf32>
    %143 = math.tanh %142 : vector<2x32xf32>
    %144 = arith.mulf %139, %143 : vector<2x32xf32>
    %145 = arith.truncf %144 : vector<2x32xf32> to vector<2x32xbf16>
    %c2 = arith.constant 2 : index
    %c0_40 = arith.constant 0 : index
    %c0_41 = arith.constant 0 : index
    %146 = vector.load %arg7[%c2, %c0_40, %c0_41] : memref<8x32x10xbf16, #tpu.memory_space<vmem>>, vector<1x32x10xbf16>
    %147 = vector.shape_cast %146 : vector<1x32x10xbf16> to vector<32x10xbf16>
    %cst_42 = arith.constant dense<0.000000e+00> : vector<2x10xf32>
    %148 = tpu.matmul %145, %147, %cst_42 {dimension_numbers = #tpu.dot_dimension_numbers<[1], [0], [0], [1], [0, 0, 1, 1], [], []>} : vector<2x32xbf16>, vector<32x10xbf16>, vector<2x10xf32> -> vector<2x10xf32>
    %149 = arith.addf %105, %148 : vector<2x10xf32>
    %150 = vector.extract_strided_slice %12 {offsets = [6, 0], sizes = [2, 128], strides = [1, 1]} : vector<16x128xf32> to vector<2x128xf32>
    %151 = arith.addf %150, %6 : vector<2x128xf32>
    %cst_43 = arith.constant dense<0.000000e+00> : vector<2x128xf32>
    %152 = tpu.matmul %125, %2, %cst_43 {dimension_numbers = #tpu.dot_dimension_numbers<[1], [0], [0], [1], [0, 0, 1, 1], [], []>} : vector<2x32xbf16>, vector<32x128xbf16>, vector<2x128xf32> -> vector<2x128xf32>
    %153 = arith.addf %151, %152 : vector<2x128xf32>
    %154 = arith.negf %153 : vector<2x128xf32>
    %155 = math.exp %154 : vector<2x128xf32>
    %cst_44 = arith.constant 1.000000e+00 : f32
    %156 = vector.broadcast %cst_44 : f32 to vector<2x128xf32>
    %157 = arith.addf %156, %155 : vector<2x128xf32>
    %158 = arith.divf %156, %157 : vector<2x128xf32>
    %159 = math.tanh %153 : vector<2x128xf32>
    %160 = vector.extract_strided_slice %158 {offsets = [0, 0], sizes = [2, 32], strides = [1, 1]} : vector<2x128xf32> to vector<2x32xf32>
    %161 = vector.extract_strided_slice %158 {offsets = [0, 32], sizes = [2, 32], strides = [1, 1]} : vector<2x128xf32> to vector<2x32xf32>
    %162 = vector.extract_strided_slice %159 {offsets = [0, 64], sizes = [2, 32], strides = [1, 1]} : vector<2x128xf32> to vector<2x32xf32>
    %163 = vector.extract_strided_slice %158 {offsets = [0, 96], sizes = [2, 32], strides = [1, 1]} : vector<2x128xf32> to vector<2x32xf32>
    %164 = arith.mulf %161, %122 : vector<2x32xf32>
    %165 = arith.mulf %160, %162 : vector<2x32xf32>
    %166 = arith.addf %164, %165 : vector<2x32xf32>
    %167 = math.tanh %166 : vector<2x32xf32>
    %168 = arith.mulf %163, %167 : vector<2x32xf32>
    %169 = arith.truncf %168 : vector<2x32xf32> to vector<2x32xbf16>
    %cst_45 = arith.constant dense<0.000000e+00> : vector<2x128xf32>
    %170 = tpu.matmul %169, %1, %cst_45 {dimension_numbers = #tpu.dot_dimension_numbers<[1], [0], [0], [1], [0, 0, 1, 1], [], []>} : vector<2x32xbf16>, vector<32x128xbf16>, vector<2x128xf32> -> vector<2x128xf32>
    %171 = arith.addf %170, %9 : vector<2x128xf32>
    %cst_46 = arith.constant dense<0.000000e+00> : vector<2x128xf32>
    %172 = tpu.matmul %145, %3, %cst_46 {dimension_numbers = #tpu.dot_dimension_numbers<[1], [0], [0], [1], [0, 0, 1, 1], [], []>} : vector<2x32xbf16>, vector<32x128xbf16>, vector<2x128xf32> -> vector<2x128xf32>
    %173 = arith.addf %171, %172 : vector<2x128xf32>
    %174 = arith.negf %173 : vector<2x128xf32>
    %175 = math.exp %174 : vector<2x128xf32>
    %cst_47 = arith.constant 1.000000e+00 : f32
    %176 = vector.broadcast %cst_47 : f32 to vector<2x128xf32>
    %177 = arith.addf %176, %175 : vector<2x128xf32>
    %178 = arith.divf %176, %177 : vector<2x128xf32>
    %179 = math.tanh %173 : vector<2x128xf32>
    %180 = vector.extract_strided_slice %178 {offsets = [0, 0], sizes = [2, 32], strides = [1, 1]} : vector<2x128xf32> to vector<2x32xf32>
    %181 = vector.extract_strided_slice %178 {offsets = [0, 32], sizes = [2, 32], strides = [1, 1]} : vector<2x128xf32> to vector<2x32xf32>
    %182 = vector.extract_strided_slice %179 {offsets = [0, 64], sizes = [2, 32], strides = [1, 1]} : vector<2x128xf32> to vector<2x32xf32>
    %183 = vector.extract_strided_slice %178 {offsets = [0, 96], sizes = [2, 32], strides = [1, 1]} : vector<2x128xf32> to vector<2x32xf32>
    %184 = arith.mulf %181, %142 : vector<2x32xf32>
    %185 = arith.mulf %180, %182 : vector<2x32xf32>
    %186 = arith.addf %184, %185 : vector<2x32xf32>
    %187 = math.tanh %186 : vector<2x32xf32>
    %188 = arith.mulf %183, %187 : vector<2x32xf32>
    %189 = arith.truncf %188 : vector<2x32xf32> to vector<2x32xbf16>
    %c3 = arith.constant 3 : index
    %c0_48 = arith.constant 0 : index
    %c0_49 = arith.constant 0 : index
    %190 = vector.load %arg7[%c3, %c0_48, %c0_49] : memref<8x32x10xbf16, #tpu.memory_space<vmem>>, vector<1x32x10xbf16>
    %191 = vector.shape_cast %190 : vector<1x32x10xbf16> to vector<32x10xbf16>
    %cst_50 = arith.constant dense<0.000000e+00> : vector<2x10xf32>
    %192 = tpu.matmul %189, %191, %cst_50 {dimension_numbers = #tpu.dot_dimension_numbers<[1], [0], [0], [1], [0, 0, 1, 1], [], []>} : vector<2x32xbf16>, vector<32x10xbf16>, vector<2x10xf32> -> vector<2x10xf32>
    %193 = arith.addf %149, %192 : vector<2x10xf32>
    %194 = vector.extract_strided_slice %12 {offsets = [8, 0], sizes = [2, 128], strides = [1, 1]} : vector<16x128xf32> to vector<2x128xf32>
    %195 = arith.addf %194, %6 : vector<2x128xf32>
    %cst_51 = arith.constant dense<0.000000e+00> : vector<2x128xf32>
    %196 = tpu.matmul %169, %2, %cst_51 {dimension_numbers = #tpu.dot_dimension_numbers<[1], [0], [0], [1], [0, 0, 1, 1], [], []>} : vector<2x32xbf16>, vector<32x128xbf16>, vector<2x128xf32> -> vector<2x128xf32>
    %197 = arith.addf %195, %196 : vector<2x128xf32>
    %198 = arith.negf %197 : vector<2x128xf32>
    %199 = math.exp %198 : vector<2x128xf32>
    %cst_52 = arith.constant 1.000000e+00 : f32
    %200 = vector.broadcast %cst_52 : f32 to vector<2x128xf32>
    %201 = arith.addf %200, %199 : vector<2x128xf32>
    %202 = arith.divf %200, %201 : vector<2x128xf32>
    %203 = math.tanh %197 : vector<2x128xf32>
    %204 = vector.extract_strided_slice %202 {offsets = [0, 0], sizes = [2, 32], strides = [1, 1]} : vector<2x128xf32> to vector<2x32xf32>
    %205 = vector.extract_strided_slice %202 {offsets = [0, 32], sizes = [2, 32], strides = [1, 1]} : vector<2x128xf32> to vector<2x32xf32>
    %206 = vector.extract_strided_slice %203 {offsets = [0, 64], sizes = [2, 32], strides = [1, 1]} : vector<2x128xf32> to vector<2x32xf32>
    %207 = vector.extract_strided_slice %202 {offsets = [0, 96], sizes = [2, 32], strides = [1, 1]} : vector<2x128xf32> to vector<2x32xf32>
    %208 = arith.mulf %205, %166 : vector<2x32xf32>
    %209 = arith.mulf %204, %206 : vector<2x32xf32>
    %210 = arith.addf %208, %209 : vector<2x32xf32>
    %211 = math.tanh %210 : vector<2x32xf32>
    %212 = arith.mulf %207, %211 : vector<2x32xf32>
    %213 = arith.truncf %212 : vector<2x32xf32> to vector<2x32xbf16>
    %cst_53 = arith.constant dense<0.000000e+00> : vector<2x128xf32>
    %214 = tpu.matmul %213, %1, %cst_53 {dimension_numbers = #tpu.dot_dimension_numbers<[1], [0], [0], [1], [0, 0, 1, 1], [], []>} : vector<2x32xbf16>, vector<32x128xbf16>, vector<2x128xf32> -> vector<2x128xf32>
    %215 = arith.addf %214, %9 : vector<2x128xf32>
    %cst_54 = arith.constant dense<0.000000e+00> : vector<2x128xf32>
    %216 = tpu.matmul %189, %3, %cst_54 {dimension_numbers = #tpu.dot_dimension_numbers<[1], [0], [0], [1], [0, 0, 1, 1], [], []>} : vector<2x32xbf16>, vector<32x128xbf16>, vector<2x128xf32> -> vector<2x128xf32>
    %217 = arith.addf %215, %216 : vector<2x128xf32>
    %218 = arith.negf %217 : vector<2x128xf32>
    %219 = math.exp %218 : vector<2x128xf32>
    %cst_55 = arith.constant 1.000000e+00 : f32
    %220 = vector.broadcast %cst_55 : f32 to vector<2x128xf32>
    %221 = arith.addf %220, %219 : vector<2x128xf32>
    %222 = arith.divf %220, %221 : vector<2x128xf32>
    %223 = math.tanh %217 : vector<2x128xf32>
    %224 = vector.extract_strided_slice %222 {offsets = [0, 0], sizes = [2, 32], strides = [1, 1]} : vector<2x128xf32> to vector<2x32xf32>
    %225 = vector.extract_strided_slice %222 {offsets = [0, 32], sizes = [2, 32], strides = [1, 1]} : vector<2x128xf32> to vector<2x32xf32>
    %226 = vector.extract_strided_slice %223 {offsets = [0, 64], sizes = [2, 32], strides = [1, 1]} : vector<2x128xf32> to vector<2x32xf32>
    %227 = vector.extract_strided_slice %222 {offsets = [0, 96], sizes = [2, 32], strides = [1, 1]} : vector<2x128xf32> to vector<2x32xf32>
    %228 = arith.mulf %225, %186 : vector<2x32xf32>
    %229 = arith.mulf %224, %226 : vector<2x32xf32>
    %230 = arith.addf %228, %229 : vector<2x32xf32>
    %231 = math.tanh %230 : vector<2x32xf32>
    %232 = arith.mulf %227, %231 : vector<2x32xf32>
    %233 = arith.truncf %232 : vector<2x32xf32> to vector<2x32xbf16>
    %c4 = arith.constant 4 : index
    %c0_56 = arith.constant 0 : index
    %c0_57 = arith.constant 0 : index
    %234 = vector.load %arg7[%c4, %c0_56, %c0_57] : memref<8x32x10xbf16, #tpu.memory_space<vmem>>, vector<1x32x10xbf16>
    %235 = vector.shape_cast %234 : vector<1x32x10xbf16> to vector<32x10xbf16>
    %cst_58 = arith.constant dense<0.000000e+00> : vector<2x10xf32>
    %236 = tpu.matmul %233, %235, %cst_58 {dimension_numbers = #tpu.dot_dimension_numbers<[1], [0], [0], [1], [0, 0, 1, 1], [], []>} : vector<2x32xbf16>, vector<32x10xbf16>, vector<2x10xf32> -> vector<2x10xf32>
    %237 = arith.addf %193, %236 : vector<2x10xf32>
    %238 = vector.extract_strided_slice %12 {offsets = [10, 0], sizes = [2, 128], strides = [1, 1]} : vector<16x128xf32> to vector<2x128xf32>
    %239 = arith.addf %238, %6 : vector<2x128xf32>
    %cst_59 = arith.constant dense<0.000000e+00> : vector<2x128xf32>
    %240 = tpu.matmul %213, %2, %cst_59 {dimension_numbers = #tpu.dot_dimension_numbers<[1], [0], [0], [1], [0, 0, 1, 1], [], []>} : vector<2x32xbf16>, vector<32x128xbf16>, vector<2x128xf32> -> vector<2x128xf32>
    %241 = arith.addf %239, %240 : vector<2x128xf32>
    %242 = arith.negf %241 : vector<2x128xf32>
    %243 = math.exp %242 : vector<2x128xf32>
    %cst_60 = arith.constant 1.000000e+00 : f32
    %244 = vector.broadcast %cst_60 : f32 to vector<2x128xf32>
    %245 = arith.addf %244, %243 : vector<2x128xf32>
    %246 = arith.divf %244, %245 : vector<2x128xf32>
    %247 = math.tanh %241 : vector<2x128xf32>
    %248 = vector.extract_strided_slice %246 {offsets = [0, 0], sizes = [2, 32], strides = [1, 1]} : vector<2x128xf32> to vector<2x32xf32>
    %249 = vector.extract_strided_slice %246 {offsets = [0, 32], sizes = [2, 32], strides = [1, 1]} : vector<2x128xf32> to vector<2x32xf32>
    %250 = vector.extract_strided_slice %247 {offsets = [0, 64], sizes = [2, 32], strides = [1, 1]} : vector<2x128xf32> to vector<2x32xf32>
    %251 = vector.extract_strided_slice %246 {offsets = [0, 96], sizes = [2, 32], strides = [1, 1]} : vector<2x128xf32> to vector<2x32xf32>
    %252 = arith.mulf %249, %210 : vector<2x32xf32>
    %253 = arith.mulf %248, %250 : vector<2x32xf32>
    %254 = arith.addf %252, %253 : vector<2x32xf32>
    %255 = math.tanh %254 : vector<2x32xf32>
    %256 = arith.mulf %251, %255 : vector<2x32xf32>
    %257 = arith.truncf %256 : vector<2x32xf32> to vector<2x32xbf16>
    %cst_61 = arith.constant dense<0.000000e+00> : vector<2x128xf32>
    %258 = tpu.matmul %257, %1, %cst_61 {dimension_numbers = #tpu.dot_dimension_numbers<[1], [0], [0], [1], [0, 0, 1, 1], [], []>} : vector<2x32xbf16>, vector<32x128xbf16>, vector<2x128xf32> -> vector<2x128xf32>
    %259 = arith.addf %258, %9 : vector<2x128xf32>
    %cst_62 = arith.constant dense<0.000000e+00> : vector<2x128xf32>
    %260 = tpu.matmul %233, %3, %cst_62 {dimension_numbers = #tpu.dot_dimension_numbers<[1], [0], [0], [1], [0, 0, 1, 1], [], []>} : vector<2x32xbf16>, vector<32x128xbf16>, vector<2x128xf32> -> vector<2x128xf32>
    %261 = arith.addf %259, %260 : vector<2x128xf32>
    %262 = arith.negf %261 : vector<2x128xf32>
    %263 = math.exp %262 : vector<2x128xf32>
    %cst_63 = arith.constant 1.000000e+00 : f32
    %264 = vector.broadcast %cst_63 : f32 to vector<2x128xf32>
    %265 = arith.addf %264, %263 : vector<2x128xf32>
    %266 = arith.divf %264, %265 : vector<2x128xf32>
    %267 = math.tanh %261 : vector<2x128xf32>
    %268 = vector.extract_strided_slice %266 {offsets = [0, 0], sizes = [2, 32], strides = [1, 1]} : vector<2x128xf32> to vector<2x32xf32>
    %269 = vector.extract_strided_slice %266 {offsets = [0, 32], sizes = [2, 32], strides = [1, 1]} : vector<2x128xf32> to vector<2x32xf32>
    %270 = vector.extract_strided_slice %267 {offsets = [0, 64], sizes = [2, 32], strides = [1, 1]} : vector<2x128xf32> to vector<2x32xf32>
    %271 = vector.extract_strided_slice %266 {offsets = [0, 96], sizes = [2, 32], strides = [1, 1]} : vector<2x128xf32> to vector<2x32xf32>
    %272 = arith.mulf %269, %230 : vector<2x32xf32>
    %273 = arith.mulf %268, %270 : vector<2x32xf32>
    %274 = arith.addf %272, %273 : vector<2x32xf32>
    %275 = math.tanh %274 : vector<2x32xf32>
    %276 = arith.mulf %271, %275 : vector<2x32xf32>
    %277 = arith.truncf %276 : vector<2x32xf32> to vector<2x32xbf16>
    %c5 = arith.constant 5 : index
    %c0_64 = arith.constant 0 : index
    %c0_65 = arith.constant 0 : index
    %278 = vector.load %arg7[%c5, %c0_64, %c0_65] : memref<8x32x10xbf16, #tpu.memory_space<vmem>>, vector<1x32x10xbf16>
    %279 = vector.shape_cast %278 : vector<1x32x10xbf16> to vector<32x10xbf16>
    %cst_66 = arith.constant dense<0.000000e+00> : vector<2x10xf32>
    %280 = tpu.matmul %277, %279, %cst_66 {dimension_numbers = #tpu.dot_dimension_numbers<[1], [0], [0], [1], [0, 0, 1, 1], [], []>} : vector<2x32xbf16>, vector<32x10xbf16>, vector<2x10xf32> -> vector<2x10xf32>
    %281 = arith.addf %237, %280 : vector<2x10xf32>
    %282 = vector.extract_strided_slice %12 {offsets = [12, 0], sizes = [2, 128], strides = [1, 1]} : vector<16x128xf32> to vector<2x128xf32>
    %283 = arith.addf %282, %6 : vector<2x128xf32>
    %cst_67 = arith.constant dense<0.000000e+00> : vector<2x128xf32>
    %284 = tpu.matmul %257, %2, %cst_67 {dimension_numbers = #tpu.dot_dimension_numbers<[1], [0], [0], [1], [0, 0, 1, 1], [], []>} : vector<2x32xbf16>, vector<32x128xbf16>, vector<2x128xf32> -> vector<2x128xf32>
    %285 = arith.addf %283, %284 : vector<2x128xf32>
    %286 = arith.negf %285 : vector<2x128xf32>
    %287 = math.exp %286 : vector<2x128xf32>
    %cst_68 = arith.constant 1.000000e+00 : f32
    %288 = vector.broadcast %cst_68 : f32 to vector<2x128xf32>
    %289 = arith.addf %288, %287 : vector<2x128xf32>
    %290 = arith.divf %288, %289 : vector<2x128xf32>
    %291 = math.tanh %285 : vector<2x128xf32>
    %292 = vector.extract_strided_slice %290 {offsets = [0, 0], sizes = [2, 32], strides = [1, 1]} : vector<2x128xf32> to vector<2x32xf32>
    %293 = vector.extract_strided_slice %290 {offsets = [0, 32], sizes = [2, 32], strides = [1, 1]} : vector<2x128xf32> to vector<2x32xf32>
    %294 = vector.extract_strided_slice %291 {offsets = [0, 64], sizes = [2, 32], strides = [1, 1]} : vector<2x128xf32> to vector<2x32xf32>
    %295 = vector.extract_strided_slice %290 {offsets = [0, 96], sizes = [2, 32], strides = [1, 1]} : vector<2x128xf32> to vector<2x32xf32>
    %296 = arith.mulf %293, %254 : vector<2x32xf32>
    %297 = arith.mulf %292, %294 : vector<2x32xf32>
    %298 = arith.addf %296, %297 : vector<2x32xf32>
    %299 = math.tanh %298 : vector<2x32xf32>
    %300 = arith.mulf %295, %299 : vector<2x32xf32>
    %301 = arith.truncf %300 : vector<2x32xf32> to vector<2x32xbf16>
    %cst_69 = arith.constant dense<0.000000e+00> : vector<2x128xf32>
    %302 = tpu.matmul %301, %1, %cst_69 {dimension_numbers = #tpu.dot_dimension_numbers<[1], [0], [0], [1], [0, 0, 1, 1], [], []>} : vector<2x32xbf16>, vector<32x128xbf16>, vector<2x128xf32> -> vector<2x128xf32>
    %303 = arith.addf %302, %9 : vector<2x128xf32>
    %cst_70 = arith.constant dense<0.000000e+00> : vector<2x128xf32>
    %304 = tpu.matmul %277, %3, %cst_70 {dimension_numbers = #tpu.dot_dimension_numbers<[1], [0], [0], [1], [0, 0, 1, 1], [], []>} : vector<2x32xbf16>, vector<32x128xbf16>, vector<2x128xf32> -> vector<2x128xf32>
    %305 = arith.addf %303, %304 : vector<2x128xf32>
    %306 = arith.negf %305 : vector<2x128xf32>
    %307 = math.exp %306 : vector<2x128xf32>
    %cst_71 = arith.constant 1.000000e+00 : f32
    %308 = vector.broadcast %cst_71 : f32 to vector<2x128xf32>
    %309 = arith.addf %308, %307 : vector<2x128xf32>
    %310 = arith.divf %308, %309 : vector<2x128xf32>
    %311 = math.tanh %305 : vector<2x128xf32>
    %312 = vector.extract_strided_slice %310 {offsets = [0, 0], sizes = [2, 32], strides = [1, 1]} : vector<2x128xf32> to vector<2x32xf32>
    %313 = vector.extract_strided_slice %310 {offsets = [0, 32], sizes = [2, 32], strides = [1, 1]} : vector<2x128xf32> to vector<2x32xf32>
    %314 = vector.extract_strided_slice %311 {offsets = [0, 64], sizes = [2, 32], strides = [1, 1]} : vector<2x128xf32> to vector<2x32xf32>
    %315 = vector.extract_strided_slice %310 {offsets = [0, 96], sizes = [2, 32], strides = [1, 1]} : vector<2x128xf32> to vector<2x32xf32>
    %316 = arith.mulf %313, %274 : vector<2x32xf32>
    %317 = arith.mulf %312, %314 : vector<2x32xf32>
    %318 = arith.addf %316, %317 : vector<2x32xf32>
    %319 = math.tanh %318 : vector<2x32xf32>
    %320 = arith.mulf %315, %319 : vector<2x32xf32>
    %321 = arith.truncf %320 : vector<2x32xf32> to vector<2x32xbf16>
    %c6 = arith.constant 6 : index
    %c0_72 = arith.constant 0 : index
    %c0_73 = arith.constant 0 : index
    %322 = vector.load %arg7[%c6, %c0_72, %c0_73] : memref<8x32x10xbf16, #tpu.memory_space<vmem>>, vector<1x32x10xbf16>
    %323 = vector.shape_cast %322 : vector<1x32x10xbf16> to vector<32x10xbf16>
    %cst_74 = arith.constant dense<0.000000e+00> : vector<2x10xf32>
    %324 = tpu.matmul %321, %323, %cst_74 {dimension_numbers = #tpu.dot_dimension_numbers<[1], [0], [0], [1], [0, 0, 1, 1], [], []>} : vector<2x32xbf16>, vector<32x10xbf16>, vector<2x10xf32> -> vector<2x10xf32>
    %325 = arith.addf %281, %324 : vector<2x10xf32>
    %326 = vector.extract_strided_slice %12 {offsets = [14, 0], sizes = [2, 128], strides = [1, 1]} : vector<16x128xf32> to vector<2x128xf32>
    %327 = arith.addf %326, %6 : vector<2x128xf32>
    %cst_75 = arith.constant dense<0.000000e+00> : vector<2x128xf32>
    %328 = tpu.matmul %301, %2, %cst_75 {dimension_numbers = #tpu.dot_dimension_numbers<[1], [0], [0], [1], [0, 0, 1, 1], [], []>} : vector<2x32xbf16>, vector<32x128xbf16>, vector<2x128xf32> -> vector<2x128xf32>
    %329 = arith.addf %327, %328 : vector<2x128xf32>
    %330 = arith.negf %329 : vector<2x128xf32>
    %331 = math.exp %330 : vector<2x128xf32>
    %cst_76 = arith.constant 1.000000e+00 : f32
    %332 = vector.broadcast %cst_76 : f32 to vector<2x128xf32>
    %333 = arith.addf %332, %331 : vector<2x128xf32>
    %334 = arith.divf %332, %333 : vector<2x128xf32>
    %335 = math.tanh %329 : vector<2x128xf32>
    %336 = vector.extract_strided_slice %334 {offsets = [0, 0], sizes = [2, 32], strides = [1, 1]} : vector<2x128xf32> to vector<2x32xf32>
    %337 = vector.extract_strided_slice %334 {offsets = [0, 32], sizes = [2, 32], strides = [1, 1]} : vector<2x128xf32> to vector<2x32xf32>
    %338 = vector.extract_strided_slice %335 {offsets = [0, 64], sizes = [2, 32], strides = [1, 1]} : vector<2x128xf32> to vector<2x32xf32>
    %339 = vector.extract_strided_slice %334 {offsets = [0, 96], sizes = [2, 32], strides = [1, 1]} : vector<2x128xf32> to vector<2x32xf32>
    %340 = arith.mulf %337, %298 : vector<2x32xf32>
    %341 = arith.mulf %336, %338 : vector<2x32xf32>
    %342 = arith.addf %340, %341 : vector<2x32xf32>
    %343 = math.tanh %342 : vector<2x32xf32>
    %344 = arith.mulf %339, %343 : vector<2x32xf32>
    %345 = arith.truncf %344 : vector<2x32xf32> to vector<2x32xbf16>
    %cst_77 = arith.constant dense<0.000000e+00> : vector<2x128xf32>
    %346 = tpu.matmul %345, %1, %cst_77 {dimension_numbers = #tpu.dot_dimension_numbers<[1], [0], [0], [1], [0, 0, 1, 1], [], []>} : vector<2x32xbf16>, vector<32x128xbf16>, vector<2x128xf32> -> vector<2x128xf32>
    %347 = arith.addf %346, %9 : vector<2x128xf32>
    %cst_78 = arith.constant dense<0.000000e+00> : vector<2x128xf32>
    %348 = tpu.matmul %321, %3, %cst_78 {dimension_numbers = #tpu.dot_dimension_numbers<[1], [0], [0], [1], [0, 0, 1, 1], [], []>} : vector<2x32xbf16>, vector<32x128xbf16>, vector<2x128xf32> -> vector<2x128xf32>
    %349 = arith.addf %347, %348 : vector<2x128xf32>
    %350 = arith.negf %349 : vector<2x128xf32>
    %351 = math.exp %350 : vector<2x128xf32>
    %cst_79 = arith.constant 1.000000e+00 : f32
    %352 = vector.broadcast %cst_79 : f32 to vector<2x128xf32>
    %353 = arith.addf %352, %351 : vector<2x128xf32>
    %354 = arith.divf %352, %353 : vector<2x128xf32>
    %355 = math.tanh %349 : vector<2x128xf32>
    %356 = vector.extract_strided_slice %354 {offsets = [0, 0], sizes = [2, 32], strides = [1, 1]} : vector<2x128xf32> to vector<2x32xf32>
    %357 = vector.extract_strided_slice %354 {offsets = [0, 32], sizes = [2, 32], strides = [1, 1]} : vector<2x128xf32> to vector<2x32xf32>
    %358 = vector.extract_strided_slice %355 {offsets = [0, 64], sizes = [2, 32], strides = [1, 1]} : vector<2x128xf32> to vector<2x32xf32>
    %359 = vector.extract_strided_slice %354 {offsets = [0, 96], sizes = [2, 32], strides = [1, 1]} : vector<2x128xf32> to vector<2x32xf32>
    %360 = arith.mulf %357, %318 : vector<2x32xf32>
    %361 = arith.mulf %356, %358 : vector<2x32xf32>
    %362 = arith.addf %360, %361 : vector<2x32xf32>
    %363 = math.tanh %362 : vector<2x32xf32>
    %364 = arith.mulf %359, %363 : vector<2x32xf32>
    %365 = arith.truncf %364 : vector<2x32xf32> to vector<2x32xbf16>
    %c7 = arith.constant 7 : index
    %c0_80 = arith.constant 0 : index
    %c0_81 = arith.constant 0 : index
    %366 = vector.load %arg7[%c7, %c0_80, %c0_81] : memref<8x32x10xbf16, #tpu.memory_space<vmem>>, vector<1x32x10xbf16>
    %367 = vector.shape_cast %366 : vector<1x32x10xbf16> to vector<32x10xbf16>
    %cst_82 = arith.constant dense<0.000000e+00> : vector<2x10xf32>
    %368 = tpu.matmul %365, %367, %cst_82 {dimension_numbers = #tpu.dot_dimension_numbers<[1], [0], [0], [1], [0, 0, 1, 1], [], []>} : vector<2x32xbf16>, vector<32x10xbf16>, vector<2x10xf32> -> vector<2x10xf32>
    %369 = arith.addf %325, %368 : vector<2x10xf32>
    %c0_83 = arith.constant 0 : index
    %c0_84 = arith.constant 0 : index
    %370 = vector.load %arg8[%c0_83, %c0_84] : memref<1x10xf32, #tpu.memory_space<vmem>>, vector<1x10xf32>
    %371 = vector.broadcast %370 : vector<1x10xf32> to vector<2x10xf32>
    %372 = arith.addf %369, %371 : vector<2x10xf32>
    %c0_85 = arith.constant 0 : index
    %c0_86 = arith.constant 0 : index
    %373 = vector.load %arg9[%c0_85, %c0_86] : memref<2x10xf32, #tpu.memory_space<vmem>>, vector<2x10xf32>
    tpu.vector_store %arg9[%c0_85, %c0_86], %372 {strides = array<i32>} : memref<2x10xf32, #tpu.memory_space<vmem>>, vector<2x10xf32>,
    return
  }
}

</mosaic_0001>

<llo_original>
// kernel: lstm_model.1
$region0: #{lstm_model.1}
  #allocation0 [shape = 'u32[]', space=smem, size = 0x4, offset = 0x4, fixed_abs, tag = 'smem constant byte address 0x4 - core index']
  #allocation1 [shape = 'u32[72,128]{1,0:T(1,128)}', space=vmem, size = 0x9000, scoped, tag = 'internal scratch']
  %s0 = inlined_call_operand.vmem [shape: f32[16,16], index: 0, kind: input, shape index: {}]
  %s1 = inlined_call_operand.vmem [shape: bf16[16,128], index: 1, kind: input, shape index: {}]
  %s2 = inlined_call_operand.vmem [shape: bf16[32,128], index: 2, kind: input, shape index: {}]
  %s3 = inlined_call_operand.vmem [shape: f32[1,128], index: 3, kind: input, shape index: {}]
  %s4 = inlined_call_operand.vmem [shape: bf16[32,128], index: 4, kind: input, shape index: {}]
  %s5 = inlined_call_operand.vmem [shape: bf16[32,128], index: 5, kind: input, shape index: {}]
  %s6 = inlined_call_operand.vmem [shape: f32[1,128], index: 6, kind: input, shape index: {}]
  %s7 = inlined_call_operand.vmem [shape: bf16[8,32,10], index: 7, kind: input, shape index: {}]
  %s8 = inlined_call_operand.vmem [shape: f32[1,10], index: 8, kind: input, shape index: {}]
  %s9 = inlined_call_operand.hbm [shape: f32[2,10], index: 9, kind: output, shape index: {}]
  %s10 = sld [smem:[#allocation0]]
  $region46: #{lstm_model.1} parent=0
    _
  %s12 = ssub.s32 1, %s10
  %s13 = scalar_select 0, %s12, %s10
  $region1: #{lstm_model.1} parent=0
    #allocation2 [shape = 'u8[1024]{0}', space=vmem, size = 0x400, scoped, tag = 'output window, operand 0, single buffered']
    #allocation3 [shape = 's32[1]{0}', space=sflag, size = 0x4, scoped, tag = 'scoped memory for lstm_model.1']
    %14 = vsyncpa [#allocation3], 0
    // Predicated region
    $region2: #{lstm_model.1} parent=1 // pred_check
      _
    $region3: #{lstm_model.1} parent=1 // pred_check_branch
      %16 = sbr.rel (0) target = $region5
    $region4: #{lstm_model.1} parent=1 // pred_region
      _
    $region5: #{lstm_model.1} parent=1 // pred_fallthru
      _
    // Predicated region
    $region6: #{lstm_model.1} parent=1 // pred_check
      _
    $region7: #{lstm_model.1} parent=1 // pred_check_branch
      %18 = sbr.rel (0) target = $region9
    $region8: #{lstm_model.1} parent=1 // pred_region
      _
    $region9: #{lstm_model.1} parent=1 // pred_fallthru
      _
    // Predicated region
    $region10: #{lstm_model.1} parent=1 // pred_check
      _
    $region11: #{lstm_model.1} parent=1 // pred_check_branch
      %20 = sbr.rel (0) target = $region13
    $region12: #{lstm_model.1} parent=1 // pred_region
      _
    $region13: #{lstm_model.1} parent=1 // pred_fallthru
      _
    // Predicated region
    $region14: #{lstm_model.1} parent=1 // pred_check
      _
    $region15: #{lstm_model.1} parent=1 // pred_check_branch
      %22 = sbr.rel (0) target = $region17
    $region16: #{lstm_model.1} parent=1 // pred_region
      _
    $region17: #{lstm_model.1} parent=1 // pred_fallthru
      _
    // Predicated region
    $region18: #{lstm_model.1} parent=1 // pred_check
      _
    $region19: #{lstm_model.1} parent=1 // pred_check_branch
      %24 = sbr.rel (0) target = $region21
    $region20: #{lstm_model.1} parent=1 // pred_region
      _
    $region21: #{lstm_model.1} parent=1 // pred_fallthru
      _
    // Predicated region
    $region22: #{lstm_model.1} parent=1 // pred_check
      _
    $region23: #{lstm_model.1} parent=1 // pred_check_branch
      %26 = sbr.rel (0) target = $region25
    $region24: #{lstm_model.1} parent=1 // pred_region
      _
    $region25: #{lstm_model.1} parent=1 // pred_fallthru
      _
    // Predicated region
    $region26: #{lstm_model.1} parent=1 // pred_check
      _
    $region27: #{lstm_model.1} parent=1 // pred_check_branch
      %28 = sbr.rel (0) target = $region29
    $region28: #{lstm_model.1} parent=1 // pred_region
      _
    $region29: #{lstm_model.1} parent=1 // pred_fallthru
      _
    // Predicated region
    $region30: #{lstm_model.1} parent=1 // pred_check
      _
    $region31: #{lstm_model.1} parent=1 // pred_check_branch
      %30 = sbr.rel (0) target = $region33
    $region32: #{lstm_model.1} parent=1 // pred_region
      _
    $region33: #{lstm_model.1} parent=1 // pred_fallthru
      _
    // Predicated region
    $region34: #{lstm_model.1} parent=1 // pred_check
      _
    $region35: #{lstm_model.1} parent=1 // pred_check_branch
      %32 = sbr.rel (0) target = $region37
    $region36: #{lstm_model.1} parent=1 // pred_region
      _
    $region37: #{lstm_model.1} parent=1 // pred_fallthru
      _
    %v34 = vld [vmem:[%s1] sm:$0xf]
    %v35 = vld [vmem:[%s1 + $0x4] sm:$0xf]
    %v36 = vld [vmem:[%s4] sm:$0xf]
    %v37 = vld [vmem:[%s4 + $0x4] sm:$0xf]
    %v38 = vld [vmem:[%s4 + $0x8] sm:$0xf]
    %v39 = vld [vmem:[%s4 + $0xc] sm:$0xf]
    %v40 = vld [vmem:[%s2] sm:$0xf]
    %v41 = vld [vmem:[%s2 + $0x4] sm:$0xf]
    %v42 = vld [vmem:[%s2 + $0x8] sm:$0xf]
    %v43 = vld [vmem:[%s2 + $0xc] sm:$0xf]
    %v44 = vld [vmem:[%s5] sm:$0xf]
    %v45 = vld [vmem:[%s5 + $0x4] sm:$0xf]
    %v46 = vld [vmem:[%s5 + $0x8] sm:$0xf]
    %v47 = vld [vmem:[%s5 + $0xc] sm:$0xf]
    %v48 = vld [vmem:[%s3] sm:$0x1]
    %v50 = vperm.slane %v48, 0
    %v52 = vld [vmem:[%s6] sm:$0x1]
    %v54 = vperm.slane %v52, 0
    %v56 = vld [vmem:[%s0] sm:$0xff]
    %v57 = vld [vmem:[%s0 + $0x8] sm:$0xff]
    %v58 = vpack.c.bf16 %v57, %v56
    %v61 = vunpack.c.l.b16 %v34
    %v62 = vunpack.c.l.b16 %v35
    %v63 = vpack.c.b16 %v62, %v61
    %vm65 = vcmask 130048
    %v67 = vsel %vm65, %v58, 0
    %69 = vmatpush.bf16.msra.mxu0 0
    %70 = vmatpush.bf16.msra.mxu0 0
    %71 = vmatpush.bf16.msra.mxu0 0
    %72 = vmatpush.bf16.msra.mxu0 0
    %73 = vmatpush.bf16.msra.mxu0 0
    %74 = vmatpush.bf16.msra.mxu0 0
    %75 = vmatpush.bf16.msra.mxu0 0
    %76 = vmatpush.bf16.msra.mxu0 %v63
    %77 = vmatmul.bf16.gmra.mxu0 %v67
    %v78 = vpop.f32.mrf.mxu0
    %v79 = vadd.f32 0.0, %v78
    %v80 = vpop.f32.mrf.mxu0
    %v81 = vadd.f32 0.0, %v80
    %82 = vdwg.mxu0
    %v83 = vadd.f32 %v79, %v50
    %v88 = vunpack.c.l.b16 %v40
    %v89 = vunpack.c.l.b16 %v41
    %v90 = vunpack.c.l.b16 %v42
    %v91 = vunpack.c.l.b16 %v43
    %v92 = vpack.c.b16 %v89, %v88
    %v93 = vpack.c.b16 %v91, %v90
    %vm96 = vcmask 261120
    %v98 = vsel %vm96, 0, 0
    %100 = vmatpush.bf16.msra.mxu0 0
    %101 = vmatpush.bf16.msra.mxu0 0
    %102 = vmatpush.bf16.msra.mxu0 0
    %103 = vmatpush.bf16.msra.mxu0 0
    %104 = vmatpush.bf16.msra.mxu0 0
    %105 = vmatpush.bf16.msra.mxu0 0
    %106 = vmatpush.bf16.msra.mxu0 %v93
    %107 = vmatpush.bf16.msra.mxu0 %v92
    %108 = vmatmul.bf16.gmra.mxu0 %v98
    %v109 = vpop.f32.mrf.mxu0
    %v110 = vadd.f32 0.0, %v109
    %v111 = vpop.f32.mrf.mxu0
    %112 = vdwg.mxu0
    %v113 = vadd.f32 %v83, %v110
    %v114 = vxor.u32 %v113, 2147483648
    %v115 = vmul.f32 %v114, 1.442695
    %v116 = vpow.pop %v115
    %v117 = vadd.f32 %v116, 1.0
    %v118 = vrcp.pop %v117
    %v119 = vmul.f32 %v117, %v118
    %v120 = vsub.f32 1.0, %v119
    %v121 = vmul.f32 %v118, %v120
    %v122 = vadd.f32 %v118, %v121
    %vm123 = vweird.f32 %v117
    %vm124 = vweird.f32 %v118
    %vm125 = vmor %vm123, %vm124
    %v126 = vsel %vm125, %v118, %v122
    %v127 = vand.u32 2147483647, %v117
    %vm128 = vcmp.eq.f32.partialorder %v127, 8.507059e+37
    %v129 = vand.u32 %v117, 2147483648
    %v130 = vor.u32 1.1754944e-38, %v129
    %v131 = vsel %vm128, %v130, %v126
    %v132 = vmul.f32 1.0, %v131
    %v133 = vtanh.pop %v113
    %v134 = vmul.f32 %v132, 0.0
    %136 = vrot.lane.b32.xlu0 %v133, 64
    %v137 = vpop.permute.xlu0 %136
    %v139 = vmul.f32 %v132, %v137
    %141 = vrot.lane.b32.xlu0 %v139, 32
    %v142 = vpop.permute.xlu0 %141
    %v144 = vadd.f32 %v134, %v142
    %v145 = vtanh.pop %v144
    %147 = vrot.lane.b32.xlu0 %v145, 64
    %v148 = vpop.permute.xlu0 %147
    %v150 = vmul.f32 %v132, %v148
    %v151 = vpack.c.bf16 %v150, %v150
    %153 = vrot.lane.b32.xlu0 %v151, 32
    %v154 = vpop.permute.xlu0 %153
    %v159 = vunpack.c.l.b16 %v36
    %v160 = vunpack.c.l.b16 %v37
    %v161 = vunpack.c.l.b16 %v38
    %v162 = vunpack.c.l.b16 %v39
    %v163 = vpack.c.b16 %v160, %v159
    %v164 = vpack.c.b16 %v162, %v161
    %v168 = vsel %vm96, %v154, 0
    %170 = vmatpush.bf16.msra.mxu0 0
    %171 = vmatpush.bf16.msra.mxu0 0
    %172 = vmatpush.bf16.msra.mxu0 0
    %173 = vmatpush.bf16.msra.mxu0 0
    %174 = vmatpush.bf16.msra.mxu0 0
    %175 = vmatpush.bf16.msra.mxu0 0
    %176 = vmatpush.bf16.msra.mxu0 %v164
    %177 = vmatpush.bf16.msra.mxu0 %v163
    %178 = vmatmul.bf16.gmra.mxu0 %v168
    %v179 = vpop.f32.mrf.mxu0
    %v180 = vadd.f32 %v54, %v179
    %v181 = vpop.f32.mrf.mxu0
    %182 = vdwg.mxu0
    %v187 = vunpack.c.l.b16 %v44
    %v188 = vunpack.c.l.b16 %v45
    %v189 = vunpack.c.l.b16 %v46
    %v190 = vunpack.c.l.b16 %v47
    %v191 = vpack.c.b16 %v188, %v187
    %v192 = vpack.c.b16 %v190, %v189
    %195 = vmatpush.bf16.msra.mxu0 0
    %196 = vmatpush.bf16.msra.mxu0 0
    %197 = vmatpush.bf16.msra.mxu0 0
    %198 = vmatpush.bf16.msra.mxu0 0
    %199 = vmatpush.bf16.msra.mxu0 0
    %200 = vmatpush.bf16.msra.mxu0 0
    %201 = vmatpush.bf16.msra.mxu0 %v192
    %202 = vmatpush.bf16.msra.mxu0 %v191
    %203 = vmatmul.bf16.gmra.mxu0 %v98
    %v204 = vpop.f32.mrf.mxu0
    %v205 = vadd.f32 0.0, %v204
    %v206 = vpop.f32.mrf.mxu0
    %207 = vdwg.mxu0
    %v208 = vadd.f32 %v180, %v205
    %v209 = vxor.u32 %v208, 2147483648
    %v210 = vmul.f32 %v209, 1.442695
    %v211 = vpow.pop %v210
    %v212 = vadd.f32 %v211, 1.0
    %v213 = vrcp.pop %v212
    %v214 = vmul.f32 %v212, %v213
    %v215 = vsub.f32 1.0, %v214
    %v216 = vmul.f32 %v213, %v215
    %v217 = vadd.f32 %v213, %v216
    %vm218 = vweird.f32 %v212
    %vm219 = vweird.f32 %v213
    %vm220 = vmor %vm218, %vm219
    %v221 = vsel %vm220, %v213, %v217
    %v222 = vand.u32 2147483647, %v212
    %vm223 = vcmp.eq.f32.partialorder %v222, 8.507059e+37
    %v224 = vand.u32 %v212, 2147483648
    %v225 = vor.u32 1.1754944e-38, %v224
    %v226 = vsel %vm223, %v225, %v221
    %v227 = vmul.f32 1.0, %v226
    %v228 = vtanh.pop %v208
    %v229 = vmul.f32 %v227, 0.0
    %231 = vrot.lane.b32.xlu0 %v228, 64
    %v232 = vpop.permute.xlu0 %231
    %v234 = vmul.f32 %v227, %v232
    %236 = vrot.lane.b32.xlu0 %v234, 32
    %v237 = vpop.permute.xlu0 %236
    %v239 = vadd.f32 %v229, %v237
    %v240 = vtanh.pop %v239
    %242 = vrot.lane.b32.xlu0 %v240, 64
    %v243 = vpop.permute.xlu0 %242
    %v245 = vmul.f32 %v227, %v243
    %v246 = vpack.c.bf16 %v245, %v245
    %v247 = vld [vmem:[%s7] sm:$0xf]
    %v248 = vld [vmem:[%s7 + $0x4] sm:$0xf]
    %v249 = vld [vmem:[%s7 + $0x8] sm:$0xf]
    %v250 = vld [vmem:[%s7 + $0xc] sm:$0xf]
    %251 = vmatpush.bf16.msra.mxu0 0
    %252 = vmatpush.bf16.msra.mxu0 0
    %253 = vmatpush.bf16.msra.mxu0 0
    %254 = vmatpush.bf16.msra.mxu0 0
    %255 = vmatpush.bf16.msra.mxu0 0
    %256 = vmatpush.bf16.msra.mxu0 0
    %257 = vmatpush.bf16.msra.mxu0 %v93
    %258 = vmatpush.bf16.msra.mxu0 %v92
    %259 = vmatmul.bf16.gmra.mxu0 %v168
    %v260 = vpop.f32.mrf.mxu0
    %v261 = vadd.f32 0.0, %v260
    %v262 = vpop.f32.mrf.mxu0
    %263 = vdwg.mxu0
    %v265 = vrot.slane %v261, 6
    %v267 = vadd.f32 %v83, %v265
    %v268 = vxor.u32 %v267, 2147483648
    %v269 = vmul.f32 %v268, 1.442695
    %v270 = vpow.pop %v269
    %v271 = vadd.f32 %v270, 1.0
    %v272 = vrcp.pop %v271
    %v273 = vmul.f32 %v271, %v272
    %v274 = vsub.f32 1.0, %v273
    %v275 = vmul.f32 %v272, %v274
    %v276 = vadd.f32 %v272, %v275
    %vm277 = vweird.f32 %v271
    %vm278 = vweird.f32 %v272
    %vm279 = vmor %vm277, %vm278
    %v280 = vsel %vm279, %v272, %v276
    %v281 = vand.u32 2147483647, %v271
    %vm282 = vcmp.eq.f32.partialorder %v281, 8.507059e+37
    %v283 = vand.u32 %v271, 2147483648
    %v284 = vor.u32 1.1754944e-38, %v283
    %v285 = vsel %vm282, %v284, %v280
    %v286 = vmul.f32 1.0, %v285
    %v287 = vtanh.pop %v267
    %v289 = vrot.slane %v144, 6
    %v291 = vmul.f32 %v286, %v289
    %293 = vrot.lane.b32.xlu0 %v287, 64
    %v294 = vpop.permute.xlu0 %293
    %v296 = vmul.f32 %v286, %v294
    %298 = vrot.lane.b32.xlu0 %v296, 32
    %v299 = vpop.permute.xlu0 %298
    %v301 = vadd.f32 %v291, %v299
    %v302 = vtanh.pop %v301
    %304 = vrot.lane.b32.xlu0 %v302, 64
    %v305 = vpop.permute.xlu0 %304
    %v307 = vmul.f32 %v286, %v305
    %v308 = vpack.c.bf16 %v307, %v307
    %v310 = vrot.slane %v308, 1
    %311 = vrot.lane.b32.xlu0 %v310, 32
    %v312 = vpop.permute.xlu0 %311
    %v314 = vsel %vm96, %v312, 0
    %316 = vmatpush.bf16.msra.mxu0 0
    %317 = vmatpush.bf16.msra.mxu0 0
    %318 = vmatpush.bf16.msra.mxu0 0
    %319 = vmatpush.bf16.msra.mxu0 0
    %320 = vmatpush.bf16.msra.mxu0 0
    %321 = vmatpush.bf16.msra.mxu0 0
    %322 = vmatpush.bf16.msra.mxu0 %v164
    %323 = vmatpush.bf16.msra.mxu0 %v163
    %324 = vmatmul.bf16.gmra.mxu0 %v314
    %v325 = vpop.f32.mrf.mxu0
    %v326 = vadd.f32 %v54, %v325
    %v327 = vpop.f32.mrf.mxu0
    %328 = vdwg.mxu0
    %330 = vrot.lane.b32.xlu0 %v246, 32
    %v331 = vpop.permute.xlu0 %330
    %v333 = vsel %vm96, %v331, 0
    %335 = vmatpush.bf16.msra.mxu0 0
    %336 = vmatpush.bf16.msra.mxu0 0
    %337 = vmatpush.bf16.msra.mxu0 0
    %338 = vmatpush.bf16.msra.mxu0 0
    %339 = vmatpush.bf16.msra.mxu0 0
    %340 = vmatpush.bf16.msra.mxu0 0
    %341 = vmatpush.bf16.msra.mxu0 %v192
    %342 = vmatpush.bf16.msra.mxu0 %v191
    %343 = vmatmul.bf16.gmra.mxu0 %v333
    %v344 = vpop.f32.mrf.mxu0
    %v345 = vadd.f32 0.0, %v344
    %v346 = vpop.f32.mrf.mxu0
    %347 = vdwg.mxu0
    %v348 = vadd.f32 %v326, %v345
    %v349 = vxor.u32 %v348, 2147483648
    %v350 = vmul.f32 %v349, 1.442695
    %v351 = vpow.pop %v350
    %v352 = vadd.f32 %v351, 1.0
    %v353 = vrcp.pop %v352
    %v354 = vmul.f32 %v352, %v353
    %v355 = vsub.f32 1.0, %v354
    %v356 = vmul.f32 %v353, %v355
    %v357 = vadd.f32 %v353, %v356
    %vm358 = vweird.f32 %v352
    %vm359 = vweird.f32 %v353
    %vm360 = vmor %vm358, %vm359
    %v361 = vsel %vm360, %v353, %v357
    %v362 = vand.u32 2147483647, %v352
    %vm363 = vcmp.eq.f32.partialorder %v362, 8.507059e+37
    %v364 = vand.u32 %v352, 2147483648
    %v365 = vor.u32 1.1754944e-38, %v364
    %v366 = vsel %vm363, %v365, %v361
    %v367 = vmul.f32 1.0, %v366
    %v368 = vtanh.pop %v348
    %v369 = vmul.f32 %v367, %v239
    %371 = vrot.lane.b32.xlu0 %v368, 64
    %v372 = vpop.permute.xlu0 %371
    %v374 = vmul.f32 %v367, %v372
    %376 = vrot.lane.b32.xlu0 %v374, 32
    %v377 = vpop.permute.xlu0 %376
    %v379 = vadd.f32 %v369, %v377
    %v380 = vtanh.pop %v379
    %382 = vrot.lane.b32.xlu0 %v380, 64
    %v383 = vpop.permute.xlu0 %382
    %v385 = vmul.f32 %v367, %v383
    %v386 = vpack.c.bf16 %v385, %v385
    %s387 = scalar_lea.vmem %s7, 16
    %v388 = vld [vmem:[%s387] sm:$0xf]
    %v389 = vld [vmem:[%s387 + $0x4] sm:$0xf]
    %v390 = vld [vmem:[%s387 + $0x8] sm:$0xf]
    %v391 = vld [vmem:[%s387 + $0xc] sm:$0xf]
    %393 = vrot.lane.b32.xlu0 %v386, 32
    %v394 = vpop.permute.xlu0 %393
    %v399 = vunpack.c.l.b16 %v388
    %v400 = vunpack.c.l.b16 %v389
    %v401 = vunpack.c.l.b16 %v390
    %v402 = vunpack.c.l.b16 %v391
    %v403 = vpack.c.b16 %v400, %v399
    %v404 = vpack.c.b16 %v402, %v401
    %v408 = vsel %vm96, %v394, 0
    %410 = vmatpush.bf16.msra.mxu0 0
    %411 = vmatpush.bf16.msra.mxu0 0
    %412 = vmatpush.bf16.msra.mxu0 0
    %413 = vmatpush.bf16.msra.mxu0 0
    %414 = vmatpush.bf16.msra.mxu0 0
    %415 = vmatpush.bf16.msra.mxu0 0
    %416 = vmatpush.bf16.msra.mxu0 %v404
    %417 = vmatpush.bf16.msra.mxu0 %v403
    %418 = vmatmul.bf16.gmra.mxu0 %v408
    %v419 = vpop.f32.mrf.mxu0
    %v420 = vadd.f32 0.0, %v419
    %v421 = vpop.f32.mrf.mxu0
    %422 = vdwg.mxu0
    %v427 = vunpack.c.l.b16 %v247
    %v428 = vunpack.c.l.b16 %v248
    %v429 = vunpack.c.l.b16 %v249
    %v430 = vunpack.c.l.b16 %v250
    %v431 = vpack.c.b16 %v428, %v427
    %v432 = vpack.c.b16 %v430, %v429
    %435 = vmatpush.bf16.msra.mxu0 0
    %436 = vmatpush.bf16.msra.mxu0 0
    %437 = vmatpush.bf16.msra.mxu0 0
    %438 = vmatpush.bf16.msra.mxu0 0
    %439 = vmatpush.bf16.msra.mxu0 0
    %440 = vmatpush.bf16.msra.mxu0 0
    %441 = vmatpush.bf16.msra.mxu0 %v432
    %442 = vmatpush.bf16.msra.mxu0 %v431
    %443 = vmatmul.bf16.gmra.mxu0 %v333
    %v444 = vpop.f32.mrf.mxu0
    %v445 = vadd.f32 %v420, %v444
    %v446 = vpop.f32.mrf.mxu0
    %447 = vdwg.mxu0
    %448 = vmatpush.bf16.msra.mxu0 0
    %449 = vmatpush.bf16.msra.mxu0 0
    %450 = vmatpush.bf16.msra.mxu0 0
    %451 = vmatpush.bf16.msra.mxu0 0
    %452 = vmatpush.bf16.msra.mxu0 0
    %453 = vmatpush.bf16.msra.mxu0 0
    %454 = vmatpush.bf16.msra.mxu0 %v93
    %455 = vmatpush.bf16.msra.mxu0 %v92
    %456 = vmatmul.bf16.gmra.mxu0 %v314
    %v457 = vpop.f32.mrf.mxu0
    %v458 = vadd.f32 0.0, %v457
    %v459 = vpop.f32.mrf.mxu0
    %460 = vdwg.mxu0
    %v462 = vrot.slane %v458, 4
    %v464 = vadd.f32 %v83, %v462
    %v465 = vxor.u32 %v464, 2147483648
    %v466 = vmul.f32 %v465, 1.442695
    %v467 = vpow.pop %v466
    %v468 = vadd.f32 %v467, 1.0
    %v469 = vrcp.pop %v468
    %v470 = vmul.f32 %v468, %v469
    %v471 = vsub.f32 1.0, %v470
    %v472 = vmul.f32 %v469, %v471
    %v473 = vadd.f32 %v469, %v472
    %vm474 = vweird.f32 %v468
    %vm475 = vweird.f32 %v469
    %vm476 = vmor %vm474, %vm475
    %v477 = vsel %vm476, %v469, %v473
    %v478 = vand.u32 2147483647, %v468
    %vm479 = vcmp.eq.f32.partialorder %v478, 8.507059e+37
    %v480 = vand.u32 %v468, 2147483648
    %v481 = vor.u32 1.1754944e-38, %v480
    %v482 = vsel %vm479, %v481, %v477
    %v483 = vmul.f32 1.0, %v482
    %v484 = vtanh.pop %v464
    %v486 = vrot.slane %v301, 6
    %v488 = vmul.f32 %v483, %v486
    %490 = vrot.lane.b32.xlu0 %v484, 64
    %v491 = vpop.permute.xlu0 %490
    %v493 = vmul.f32 %v483, %v491
    %495 = vrot.lane.b32.xlu0 %v493, 32
    %v496 = vpop.permute.xlu0 %495
    %v498 = vadd.f32 %v488, %v496
    %v499 = vtanh.pop %v498
    %501 = vrot.lane.b32.xlu0 %v499, 64
    %v502 = vpop.permute.xlu0 %501
    %v504 = vmul.f32 %v483, %v502
    %v505 = vpack.c.bf16 %v504, %v504
    %v507 = vrot.slane %v505, 2
    %508 = vrot.lane.b32.xlu0 %v507, 32
    %v509 = vpop.permute.xlu0 %508
    %v511 = vsel %vm96, %v509, 0
    %513 = vmatpush.bf16.msra.mxu0 0
    %514 = vmatpush.bf16.msra.mxu0 0
    %515 = vmatpush.bf16.msra.mxu0 0
    %516 = vmatpush.bf16.msra.mxu0 0
    %517 = vmatpush.bf16.msra.mxu0 0
    %518 = vmatpush.bf16.msra.mxu0 0
    %519 = vmatpush.bf16.msra.mxu0 %v164
    %520 = vmatpush.bf16.msra.mxu0 %v163
    %521 = vmatmul.bf16.gmra.mxu0 %v511
    %v522 = vpop.f32.mrf.mxu0
    %v523 = vadd.f32 %v54, %v522
    %v524 = vpop.f32.mrf.mxu0
    %525 = vdwg.mxu0
    %526 = vmatpush.bf16.msra.mxu0 0
    %527 = vmatpush.bf16.msra.mxu0 0
    %528 = vmatpush.bf16.msra.mxu0 0
    %529 = vmatpush.bf16.msra.mxu0 0
    %530 = vmatpush.bf16.msra.mxu0 0
    %531 = vmatpush.bf16.msra.mxu0 0
    %532 = vmatpush.bf16.msra.mxu0 %v192
    %533 = vmatpush.bf16.msra.mxu0 %v191
    %534 = vmatmul.bf16.gmra.mxu0 %v408
    %v535 = vpop.f32.mrf.mxu0
    %v536 = vadd.f32 0.0, %v535
    %v537 = vpop.f32.mrf.mxu0
    %538 = vdwg.mxu0
    %v539 = vadd.f32 %v523, %v536
    %v540 = vxor.u32 %v539, 2147483648
    %v541 = vmul.f32 %v540, 1.442695
    %v542 = vpow.pop %v541
    %v543 = vadd.f32 %v542, 1.0
    %v544 = vrcp.pop %v543
    %v545 = vmul.f32 %v543, %v544
    %v546 = vsub.f32 1.0, %v545
    %v547 = vmul.f32 %v544, %v546
    %v548 = vadd.f32 %v544, %v547
    %vm549 = vweird.f32 %v543
    %vm550 = vweird.f32 %v544
    %vm551 = vmor %vm549, %vm550
    %v552 = vsel %vm551, %v544, %v548
    %v553 = vand.u32 2147483647, %v543
    %vm554 = vcmp.eq.f32.partialorder %v553, 8.507059e+37
    %v555 = vand.u32 %v543, 2147483648
    %v556 = vor.u32 1.1754944e-38, %v555
    %v557 = vsel %vm554, %v556, %v552
    %v558 = vmul.f32 1.0, %v557
    %v559 = vtanh.pop %v539
    %v560 = vmul.f32 %v558, %v379
    %562 = vrot.lane.b32.xlu0 %v559, 64
    %v563 = vpop.permute.xlu0 %562
    %v565 = vmul.f32 %v558, %v563
    %567 = vrot.lane.b32.xlu0 %v565, 32
    %v568 = vpop.permute.xlu0 %567
    %v570 = vadd.f32 %v560, %v568
    %v571 = vtanh.pop %v570
    %573 = vrot.lane.b32.xlu0 %v571, 64
    %v574 = vpop.permute.xlu0 %573
    %v576 = vmul.f32 %v558, %v574
    %v577 = vpack.c.bf16 %v576, %v576
    %s578 = scalar_lea.vmem %s7, 32
    %v579 = vld [vmem:[%s578] sm:$0xf]
    %v580 = vld [vmem:[%s578 + $0x4] sm:$0xf]
    %v581 = vld [vmem:[%s578 + $0x8] sm:$0xf]
    %v582 = vld [vmem:[%s578 + $0xc] sm:$0xf]
    %584 = vrot.lane.b32.xlu0 %v577, 32
    %v585 = vpop.permute.xlu0 %584
    %v590 = vunpack.c.l.b16 %v579
    %v591 = vunpack.c.l.b16 %v580
    %v592 = vunpack.c.l.b16 %v581
    %v593 = vunpack.c.l.b16 %v582
    %v594 = vpack.c.b16 %v591, %v590
    %v595 = vpack.c.b16 %v593, %v592
    %v599 = vsel %vm96, %v585, 0
    %601 = vmatpush.bf16.msra.mxu0 0
    %602 = vmatpush.bf16.msra.mxu0 0
    %603 = vmatpush.bf16.msra.mxu0 0
    %604 = vmatpush.bf16.msra.mxu0 0
    %605 = vmatpush.bf16.msra.mxu0 0
    %606 = vmatpush.bf16.msra.mxu0 0
    %607 = vmatpush.bf16.msra.mxu0 %v595
    %608 = vmatpush.bf16.msra.mxu0 %v594
    %609 = vmatmul.bf16.gmra.mxu0 %v599
    %v610 = vpop.f32.mrf.mxu0
    %v611 = vadd.f32 0.0, %v610
    %v612 = vpop.f32.mrf.mxu0
    %613 = vdwg.mxu0
    %v614 = vadd.f32 %v445, %v611
    %615 = vmatpush.bf16.msra.mxu0 0
    %616 = vmatpush.bf16.msra.mxu0 0
    %617 = vmatpush.bf16.msra.mxu0 0
    %618 = vmatpush.bf16.msra.mxu0 0
    %619 = vmatpush.bf16.msra.mxu0 0
    %620 = vmatpush.bf16.msra.mxu0 0
    %621 = vmatpush.bf16.msra.mxu0 %v93
    %622 = vmatpush.bf16.msra.mxu0 %v92
    %623 = vmatmul.bf16.gmra.mxu0 %v511
    %v624 = vpop.f32.mrf.mxu0
    %v625 = vadd.f32 0.0, %v624
    %v626 = vpop.f32.mrf.mxu0
    %627 = vdwg.mxu0
    %v629 = vrot.slane %v625, 2
    %v631 = vadd.f32 %v83, %v629
    %v632 = vxor.u32 %v631, 2147483648
    %v633 = vmul.f32 %v632, 1.442695
    %v634 = vpow.pop %v633
    %v635 = vadd.f32 %v634, 1.0
    %v636 = vrcp.pop %v635
    %v637 = vmul.f32 %v635, %v636
    %v638 = vsub.f32 1.0, %v637
    %v639 = vmul.f32 %v636, %v638
    %v640 = vadd.f32 %v636, %v639
    %vm641 = vweird.f32 %v635
    %vm642 = vweird.f32 %v636
    %vm643 = vmor %vm641, %vm642
    %v644 = vsel %vm643, %v636, %v640
    %v645 = vand.u32 2147483647, %v635
    %vm646 = vcmp.eq.f32.partialorder %v645, 8.507059e+37
    %v647 = vand.u32 %v635, 2147483648
    %v648 = vor.u32 1.1754944e-38, %v647
    %v649 = vsel %vm646, %v648, %v644
    %v650 = vmul.f32 1.0, %v649
    %v651 = vtanh.pop %v631
    %v653 = vrot.slane %v498, 6
    %v655 = vmul.f32 %v650, %v653
    %657 = vrot.lane.b32.xlu0 %v651, 64
    %v658 = vpop.permute.xlu0 %657
    %v660 = vmul.f32 %v650, %v658
    %662 = vrot.lane.b32.xlu0 %v660, 32
    %v663 = vpop.permute.xlu0 %662
    %v665 = vadd.f32 %v655, %v663
    %v666 = vtanh.pop %v665
    %668 = vrot.lane.b32.xlu0 %v666, 64
    %v669 = vpop.permute.xlu0 %668
    %v671 = vmul.f32 %v650, %v669
    %v672 = vpack.c.bf16 %v671, %v671
    %v674 = vrot.slane %v672, 3
    %675 = vrot.lane.b32.xlu0 %v674, 32
    %v676 = vpop.permute.xlu0 %675
    %v678 = vsel %vm96, %v676, 0
    %680 = vmatpush.bf16.msra.mxu0 0
    %681 = vmatpush.bf16.msra.mxu0 0
    %682 = vmatpush.bf16.msra.mxu0 0
    %683 = vmatpush.bf16.msra.mxu0 0
    %684 = vmatpush.bf16.msra.mxu0 0
    %685 = vmatpush.bf16.msra.mxu0 0
    %686 = vmatpush.bf16.msra.mxu0 %v164
    %687 = vmatpush.bf16.msra.mxu0 %v163
    %688 = vmatmul.bf16.gmra.mxu0 %v678
    %v689 = vpop.f32.mrf.mxu0
    %v690 = vadd.f32 %v54, %v689
    %v691 = vpop.f32.mrf.mxu0
    %692 = vdwg.mxu0
    %693 = vmatpush.bf16.msra.mxu0 0
    %694 = vmatpush.bf16.msra.mxu0 0
    %695 = vmatpush.bf16.msra.mxu0 0
    %696 = vmatpush.bf16.msra.mxu0 0
    %697 = vmatpush.bf16.msra.mxu0 0
    %698 = vmatpush.bf16.msra.mxu0 0
    %699 = vmatpush.bf16.msra.mxu0 %v192
    %700 = vmatpush.bf16.msra.mxu0 %v191
    %701 = vmatmul.bf16.gmra.mxu0 %v599
    %v702 = vpop.f32.mrf.mxu0
    %v703 = vadd.f32 0.0, %v702
    %v704 = vpop.f32.mrf.mxu0
    %705 = vdwg.mxu0
    %v706 = vadd.f32 %v690, %v703
    %v707 = vxor.u32 %v706, 2147483648
    %v708 = vmul.f32 %v707, 1.442695
    %v709 = vpow.pop %v708
    %v710 = vadd.f32 %v709, 1.0
    %v711 = vrcp.pop %v710
    %v712 = vmul.f32 %v710, %v711
    %v713 = vsub.f32 1.0, %v712
    %v714 = vmul.f32 %v711, %v713
    %v715 = vadd.f32 %v711, %v714
    %vm716 = vweird.f32 %v710
    %vm717 = vweird.f32 %v711
    %vm718 = vmor %vm716, %vm717
    %v719 = vsel %vm718, %v711, %v715
    %v720 = vand.u32 2147483647, %v710
    %vm721 = vcmp.eq.f32.partialorder %v720, 8.507059e+37
    %v722 = vand.u32 %v710, 2147483648
    %v723 = vor.u32 1.1754944e-38, %v722
    %v724 = vsel %vm721, %v723, %v719
    %v725 = vmul.f32 1.0, %v724
    %v726 = vtanh.pop %v706
    %v727 = vmul.f32 %v725, %v570
    %729 = vrot.lane.b32.xlu0 %v726, 64
    %v730 = vpop.permute.xlu0 %729
    %v732 = vmul.f32 %v725, %v730
    %734 = vrot.lane.b32.xlu0 %v732, 32
    %v735 = vpop.permute.xlu0 %734
    %v737 = vadd.f32 %v727, %v735
    %v738 = vtanh.pop %v737
    %740 = vrot.lane.b32.xlu0 %v738, 64
    %v741 = vpop.permute.xlu0 %740
    %v743 = vmul.f32 %v725, %v741
    %v744 = vpack.c.bf16 %v743, %v743
    %s745 = scalar_lea.vmem %s7, 48
    %v746 = vld [vmem:[%s745] sm:$0xf]
    %v747 = vld [vmem:[%s745 + $0x4] sm:$0xf]
    %v748 = vld [vmem:[%s745 + $0x8] sm:$0xf]
    %v749 = vld [vmem:[%s745 + $0xc] sm:$0xf]
    %751 = vrot.lane.b32.xlu0 %v744, 32
    %v752 = vpop.permute.xlu0 %751
    %v757 = vunpack.c.l.b16 %v746
    %v758 = vunpack.c.l.b16 %v747
    %v759 = vunpack.c.l.b16 %v748
    %v760 = vunpack.c.l.b16 %v749
    %v761 = vpack.c.b16 %v758, %v757
    %v762 = vpack.c.b16 %v760, %v759
    %v766 = vsel %vm96, %v752, 0
    %768 = vmatpush.bf16.msra.mxu0 0
    %769 = vmatpush.bf16.msra.mxu0 0
    %770 = vmatpush.bf16.msra.mxu0 0
    %771 = vmatpush.bf16.msra.mxu0 0
    %772 = vmatpush.bf16.msra.mxu0 0
    %773 = vmatpush.bf16.msra.mxu0 0
    %774 = vmatpush.bf16.msra.mxu0 %v762
    %775 = vmatpush.bf16.msra.mxu0 %v761
    %776 = vmatmul.bf16.gmra.mxu0 %v766
    %v777 = vpop.f32.mrf.mxu0
    %v778 = vadd.f32 0.0, %v777
    %v779 = vpop.f32.mrf.mxu0
    %780 = vdwg.mxu0
    %v781 = vadd.f32 %v614, %v778
    %v782 = vadd.f32 %v81, %v50
    %783 = vmatpush.bf16.msra.mxu0 0
    %784 = vmatpush.bf16.msra.mxu0 0
    %785 = vmatpush.bf16.msra.mxu0 0
    %786 = vmatpush.bf16.msra.mxu0 0
    %787 = vmatpush.bf16.msra.mxu0 0
    %788 = vmatpush.bf16.msra.mxu0 0
    %789 = vmatpush.bf16.msra.mxu0 %v93
    %790 = vmatpush.bf16.msra.mxu0 %v92
    %791 = vmatmul.bf16.gmra.mxu0 %v678
    %v792 = vpop.f32.mrf.mxu0
    %v793 = vadd.f32 0.0, %v792
    %v794 = vpop.f32.mrf.mxu0
    %795 = vdwg.mxu0
    %v796 = vadd.f32 %v782, %v793
    %v797 = vxor.u32 %v796, 2147483648
    %v798 = vmul.f32 %v797, 1.442695
    %v799 = vpow.pop %v798
    %v800 = vadd.f32 %v799, 1.0
    %v801 = vrcp.pop %v800
    %v802 = vmul.f32 %v800, %v801
    %v803 = vsub.f32 1.0, %v802
    %v804 = vmul.f32 %v801, %v803
    %v805 = vadd.f32 %v801, %v804
    %vm806 = vweird.f32 %v800
    %vm807 = vweird.f32 %v801
    %vm808 = vmor %vm806, %vm807
    %v809 = vsel %vm808, %v801, %v805
    %v810 = vand.u32 2147483647, %v800
    %vm811 = vcmp.eq.f32.partialorder %v810, 8.507059e+37
    %v812 = vand.u32 %v800, 2147483648
    %v813 = vor.u32 1.1754944e-38, %v812
    %v814 = vsel %vm811, %v813, %v809
    %v815 = vmul.f32 1.0, %v814
    %v816 = vtanh.pop %v796
    %v818 = vrot.slane %v665, 6
    %v820 = vmul.f32 %v815, %v818
    %822 = vrot.lane.b32.xlu0 %v816, 64
    %v823 = vpop.permute.xlu0 %822
    %v825 = vmul.f32 %v815, %v823
    %827 = vrot.lane.b32.xlu0 %v825, 32
    %v828 = vpop.permute.xlu0 %827
    %v830 = vadd.f32 %v820, %v828
    %v831 = vtanh.pop %v830
    %833 = vrot.lane.b32.xlu0 %v831, 64
    %v834 = vpop.permute.xlu0 %833
    %v836 = vmul.f32 %v815, %v834
    %v837 = vpack.c.bf16 %v836, %v836
    %839 = vrot.lane.b32.xlu0 %v837, 32
    %v840 = vpop.permute.xlu0 %839
    %v842 = vsel %vm96, %v840, 0
    %844 = vmatpush.bf16.msra.mxu0 0
    %845 = vmatpush.bf16.msra.mxu0 0
    %846 = vmatpush.bf16.msra.mxu0 0
    %847 = vmatpush.bf16.msra.mxu0 0
    %848 = vmatpush.bf16.msra.mxu0 0
    %849 = vmatpush.bf16.msra.mxu0 0
    %850 = vmatpush.bf16.msra.mxu0 %v164
    %851 = vmatpush.bf16.msra.mxu0 %v163
    %852 = vmatmul.bf16.gmra.mxu0 %v842
    %v853 = vpop.f32.mrf.mxu0
    %v854 = vadd.f32 %v54, %v853
    %v855 = vpop.f32.mrf.mxu0
    %856 = vdwg.mxu0
    %857 = vmatpush.bf16.msra.mxu0 0
    %858 = vmatpush.bf16.msra.mxu0 0
    %859 = vmatpush.bf16.msra.mxu0 0
    %860 = vmatpush.bf16.msra.mxu0 0
    %861 = vmatpush.bf16.msra.mxu0 0
    %862 = vmatpush.bf16.msra.mxu0 0
    %863 = vmatpush.bf16.msra.mxu0 %v192
    %864 = vmatpush.bf16.msra.mxu0 %v191
    %865 = vmatmul.bf16.gmra.mxu0 %v766
    %v866 = vpop.f32.mrf.mxu0
    %v867 = vadd.f32 0.0, %v866
    %v868 = vpop.f32.mrf.mxu0
    %869 = vdwg.mxu0
    %v870 = vadd.f32 %v854, %v867
    %v871 = vxor.u32 %v870, 2147483648
    %v872 = vmul.f32 %v871, 1.442695
    %v873 = vpow.pop %v872
    %v874 = vadd.f32 %v873, 1.0
    %v875 = vrcp.pop %v874
    %v876 = vmul.f32 %v874, %v875
    %v877 = vsub.f32 1.0, %v876
    %v878 = vmul.f32 %v875, %v877
    %v879 = vadd.f32 %v875, %v878
    %vm880 = vweird.f32 %v874
    %vm881 = vweird.f32 %v875
    %vm882 = vmor %vm880, %vm881
    %v883 = vsel %vm882, %v875, %v879
    %v884 = vand.u32 2147483647, %v874
    %vm885 = vcmp.eq.f32.partialorder %v884, 8.507059e+37
    %v886 = vand.u32 %v874, 2147483648
    %v887 = vor.u32 1.1754944e-38, %v886
    %v888 = vsel %vm885, %v887, %v883
    %v889 = vmul.f32 1.0, %v888
    %v890 = vtanh.pop %v870
    %v891 = vmul.f32 %v889, %v737
    %893 = vrot.lane.b32.xlu0 %v890, 64
    %v894 = vpop.permute.xlu0 %893
    %v896 = vmul.f32 %v889, %v894
    %898 = vrot.lane.b32.xlu0 %v896, 32
    %v899 = vpop.permute.xlu0 %898
    %v901 = vadd.f32 %v891, %v899
    %v902 = vtanh.pop %v901
    %904 = vrot.lane.b32.xlu0 %v902, 64
    %v905 = vpop.permute.xlu0 %904
    %v907 = vmul.f32 %v889, %v905
    %v908 = vpack.c.bf16 %v907, %v907
    %s909 = scalar_lea.vmem %s7, 64
    %v910 = vld [vmem:[%s909] sm:$0xf]
    %v911 = vld [vmem:[%s909 + $0x4] sm:$0xf]
    %v912 = vld [vmem:[%s909 + $0x8] sm:$0xf]
    %v913 = vld [vmem:[%s909 + $0xc] sm:$0xf]
    %915 = vrot.lane.b32.xlu0 %v908, 32
    %v916 = vpop.permute.xlu0 %915
    %v921 = vunpack.c.l.b16 %v910
    %v922 = vunpack.c.l.b16 %v911
    %v923 = vunpack.c.l.b16 %v912
    %v924 = vunpack.c.l.b16 %v913
    %v925 = vpack.c.b16 %v922, %v921
    %v926 = vpack.c.b16 %v924, %v923
    %v930 = vsel %vm96, %v916, 0
    %932 = vmatpush.bf16.msra.mxu0 0
    %933 = vmatpush.bf16.msra.mxu0 0
    %934 = vmatpush.bf16.msra.mxu0 0
    %935 = vmatpush.bf16.msra.mxu0 0
    %936 = vmatpush.bf16.msra.mxu0 0
    %937 = vmatpush.bf16.msra.mxu0 0
    %938 = vmatpush.bf16.msra.mxu0 %v926
    %939 = vmatpush.bf16.msra.mxu0 %v925
    %940 = vmatmul.bf16.gmra.mxu0 %v930
    %v941 = vpop.f32.mrf.mxu0
    %v942 = vadd.f32 0.0, %v941
    %v943 = vpop.f32.mrf.mxu0
    %944 = vdwg.mxu0
    %v945 = vadd.f32 %v781, %v942
    %946 = vmatpush.bf16.msra.mxu0 0
    %947 = vmatpush.bf16.msra.mxu0 0
    %948 = vmatpush.bf16.msra.mxu0 0
    %949 = vmatpush.bf16.msra.mxu0 0
    %950 = vmatpush.bf16.msra.mxu0 0
    %951 = vmatpush.bf16.msra.mxu0 0
    %952 = vmatpush.bf16.msra.mxu0 %v93
    %953 = vmatpush.bf16.msra.mxu0 %v92
    %954 = vmatmul.bf16.gmra.mxu0 %v842
    %v955 = vpop.f32.mrf.mxu0
    %v956 = vadd.f32 0.0, %v955
    %v957 = vpop.f32.mrf.mxu0
    %958 = vdwg.mxu0
    %v960 = vrot.slane %v956, 6
    %v962 = vadd.f32 %v782, %v960
    %v963 = vxor.u32 %v962, 2147483648
    %v964 = vmul.f32 %v963, 1.442695
    %v965 = vpow.pop %v964
    %v966 = vadd.f32 %v965, 1.0
    %v967 = vrcp.pop %v966
    %v968 = vmul.f32 %v966, %v967
    %v969 = vsub.f32 1.0, %v968
    %v970 = vmul.f32 %v967, %v969
    %v971 = vadd.f32 %v967, %v970
    %vm972 = vweird.f32 %v966
    %vm973 = vweird.f32 %v967
    %vm974 = vmor %vm972, %vm973
    %v975 = vsel %vm974, %v967, %v971
    %v976 = vand.u32 2147483647, %v966
    %vm977 = vcmp.eq.f32.partialorder %v976, 8.507059e+37
    %v978 = vand.u32 %v966, 2147483648
    %v979 = vor.u32 1.1754944e-38, %v978
    %v980 = vsel %vm977, %v979, %v975
    %v981 = vmul.f32 1.0, %v980
    %v982 = vtanh.pop %v962
    %v984 = vrot.slane %v830, 6
    %v986 = vmul.f32 %v981, %v984
    %988 = vrot.lane.b32.xlu0 %v982, 64
    %v989 = vpop.permute.xlu0 %988
    %v991 = vmul.f32 %v981, %v989
    %993 = vrot.lane.b32.xlu0 %v991, 32
    %v994 = vpop.permute.xlu0 %993
    %v996 = vadd.f32 %v986, %v994
    %v997 = vtanh.pop %v996
    %999 = vrot.lane.b32.xlu0 %v997, 64
    %v1000 = vpop.permute.xlu0 %999
    %v1002 = vmul.f32 %v981, %v1000
    %v1003 = vpack.c.bf16 %v1002, %v1002
    %v1005 = vrot.slane %v1003, 1
    %1006 = vrot.lane.b32.xlu0 %v1005, 32
    %v1007 = vpop.permute.xlu0 %1006
    %v1009 = vsel %vm96, %v1007, 0
    %1011 = vmatpush.bf16.msra.mxu0 0
    %1012 = vmatpush.bf16.msra.mxu0 0
    %1013 = vmatpush.bf16.msra.mxu0 0
    %1014 = vmatpush.bf16.msra.mxu0 0
    %1015 = vmatpush.bf16.msra.mxu0 0
    %1016 = vmatpush.bf16.msra.mxu0 0
    %1017 = vmatpush.bf16.msra.mxu0 %v164
    %1018 = vmatpush.bf16.msra.mxu0 %v163
    %1019 = vmatmul.bf16.gmra.mxu0 %v1009
    %v1020 = vpop.f32.mrf.mxu0
    %v1021 = vadd.f32 %v54, %v1020
    %v1022 = vpop.f32.mrf.mxu0
    %1023 = vdwg.mxu0
    %1024 = vmatpush.bf16.msra.mxu0 0
    %1025 = vmatpush.bf16.msra.mxu0 0
    %1026 = vmatpush.bf16.msra.mxu0 0
    %1027 = vmatpush.bf16.msra.mxu0 0
    %1028 = vmatpush.bf16.msra.mxu0 0
    %1029 = vmatpush.bf16.msra.mxu0 0
    %1030 = vmatpush.bf16.msra.mxu0 %v192
    %1031 = vmatpush.bf16.msra.mxu0 %v191
    %1032 = vmatmul.bf16.gmra.mxu0 %v930
    %v1033 = vpop.f32.mrf.mxu0
    %v1034 = vadd.f32 0.0, %v1033
    %v1035 = vpop.f32.mrf.mxu0
    %1036 = vdwg.mxu0
    %v1037 = vadd.f32 %v1021, %v1034
    %v1038 = vxor.u32 %v1037, 2147483648
    %v1039 = vmul.f32 %v1038, 1.442695
    %v1040 = vpow.pop %v1039
    %v1041 = vadd.f32 %v1040, 1.0
    %v1042 = vrcp.pop %v1041
    %v1043 = vmul.f32 %v1041, %v1042
    %v1044 = vsub.f32 1.0, %v1043
    %v1045 = vmul.f32 %v1042, %v1044
    %v1046 = vadd.f32 %v1042, %v1045
    %vm1047 = vweird.f32 %v1041
    %vm1048 = vweird.f32 %v1042
    %vm1049 = vmor %vm1047, %vm1048
    %v1050 = vsel %vm1049, %v1042, %v1046
    %v1051 = vand.u32 2147483647, %v1041
    %vm1052 = vcmp.eq.f32.partialorder %v1051, 8.507059e+37
    %v1053 = vand.u32 %v1041, 2147483648
    %v1054 = vor.u32 1.1754944e-38, %v1053
    %v1055 = vsel %vm1052, %v1054, %v1050
    %v1056 = vmul.f32 1.0, %v1055
    %v1057 = vtanh.pop %v1037
    %v1058 = vmul.f32 %v1056, %v901
    %1060 = vrot.lane.b32.xlu0 %v1057, 64
    %v1061 = vpop.permute.xlu0 %1060
    %v1063 = vmul.f32 %v1056, %v1061
    %1065 = vrot.lane.b32.xlu0 %v1063, 32
    %v1066 = vpop.permute.xlu0 %1065
    %v1068 = vadd.f32 %v1058, %v1066
    %v1069 = vtanh.pop %v1068
    %1071 = vrot.lane.b32.xlu0 %v1069, 64
    %v1072 = vpop.permute.xlu0 %1071
    %v1074 = vmul.f32 %v1056, %v1072
    %v1075 = vpack.c.bf16 %v1074, %v1074
    %s1076 = scalar_lea.vmem %s7, 80
    %v1077 = vld [vmem:[%s1076] sm:$0xf]
    %v1078 = vld [vmem:[%s1076 + $0x4] sm:$0xf]
    %v1079 = vld [vmem:[%s1076 + $0x8] sm:$0xf]
    %v1080 = vld [vmem:[%s1076 + $0xc] sm:$0xf]
    %1082 = vrot.lane.b32.xlu0 %v1075, 32
    %v1083 = vpop.permute.xlu0 %1082
    %v1088 = vunpack.c.l.b16 %v1077
    %v1089 = vunpack.c.l.b16 %v1078
    %v1090 = vunpack.c.l.b16 %v1079
    %v1091 = vunpack.c.l.b16 %v1080
    %v1092 = vpack.c.b16 %v1089, %v1088
    %v1093 = vpack.c.b16 %v1091, %v1090
    %v1097 = vsel %vm96, %v1083, 0
    %1099 = vmatpush.bf16.msra.mxu0 0
    %1100 = vmatpush.bf16.msra.mxu0 0
    %1101 = vmatpush.bf16.msra.mxu0 0
    %1102 = vmatpush.bf16.msra.mxu0 0
    %1103 = vmatpush.bf16.msra.mxu0 0
    %1104 = vmatpush.bf16.msra.mxu0 0
    %1105 = vmatpush.bf16.msra.mxu0 %v1093
    %1106 = vmatpush.bf16.msra.mxu0 %v1092
    %1107 = vmatmul.bf16.gmra.mxu0 %v1097
    %v1108 = vpop.f32.mrf.mxu0
    %v1109 = vadd.f32 0.0, %v1108
    %v1110 = vpop.f32.mrf.mxu0
    %1111 = vdwg.mxu0
    %v1112 = vadd.f32 %v945, %v1109
    %1113 = vmatpush.bf16.msra.mxu0 0
    %1114 = vmatpush.bf16.msra.mxu0 0
    %1115 = vmatpush.bf16.msra.mxu0 0
    %1116 = vmatpush.bf16.msra.mxu0 0
    %1117 = vmatpush.bf16.msra.mxu0 0
    %1118 = vmatpush.bf16.msra.mxu0 0
    %1119 = vmatpush.bf16.msra.mxu0 %v93
    %1120 = vmatpush.bf16.msra.mxu0 %v92
    %1121 = vmatmul.bf16.gmra.mxu0 %v1009
    %v1122 = vpop.f32.mrf.mxu0
    %v1123 = vadd.f32 0.0, %v1122
    %v1124 = vpop.f32.mrf.mxu0
    %1125 = vdwg.mxu0
    %v1127 = vrot.slane %v1123, 4
    %v1129 = vadd.f32 %v782, %v1127
    %v1130 = vxor.u32 %v1129, 2147483648
    %v1131 = vmul.f32 %v1130, 1.442695
    %v1132 = vpow.pop %v1131
    %v1133 = vadd.f32 %v1132, 1.0
    %v1134 = vrcp.pop %v1133
    %v1135 = vmul.f32 %v1133, %v1134
    %v1136 = vsub.f32 1.0, %v1135
    %v1137 = vmul.f32 %v1134, %v1136
    %v1138 = vadd.f32 %v1134, %v1137
    %vm1139 = vweird.f32 %v1133
    %vm1140 = vweird.f32 %v1134
    %vm1141 = vmor %vm1139, %vm1140
    %v1142 = vsel %vm1141, %v1134, %v1138
    %v1143 = vand.u32 2147483647, %v1133
    %vm1144 = vcmp.eq.f32.partialorder %v1143, 8.507059e+37
    %v1145 = vand.u32 %v1133, 2147483648
    %v1146 = vor.u32 1.1754944e-38, %v1145
    %v1147 = vsel %vm1144, %v1146, %v1142
    %v1148 = vmul.f32 1.0, %v1147
    %v1149 = vtanh.pop %v1129
    %v1151 = vrot.slane %v996, 6
    %v1153 = vmul.f32 %v1148, %v1151
    %1155 = vrot.lane.b32.xlu0 %v1149, 64
    %v1156 = vpop.permute.xlu0 %1155
    %v1158 = vmul.f32 %v1148, %v1156
    %1160 = vrot.lane.b32.xlu0 %v1158, 32
    %v1161 = vpop.permute.xlu0 %1160
    %v1163 = vadd.f32 %v1153, %v1161
    %v1164 = vtanh.pop %v1163
    %1166 = vrot.lane.b32.xlu0 %v1164, 64
    %v1167 = vpop.permute.xlu0 %1166
    %v1169 = vmul.f32 %v1148, %v1167
    %v1170 = vpack.c.bf16 %v1169, %v1169
    %v1172 = vrot.slane %v1170, 2
    %1173 = vrot.lane.b32.xlu0 %v1172, 32
    %v1174 = vpop.permute.xlu0 %1173
    %v1176 = vsel %vm96, %v1174, 0
    %1178 = vmatpush.bf16.msra.mxu0 0
    %1179 = vmatpush.bf16.msra.mxu0 0
    %1180 = vmatpush.bf16.msra.mxu0 0
    %1181 = vmatpush.bf16.msra.mxu0 0
    %1182 = vmatpush.bf16.msra.mxu0 0
    %1183 = vmatpush.bf16.msra.mxu0 0
    %1184 = vmatpush.bf16.msra.mxu0 %v164
    %1185 = vmatpush.bf16.msra.mxu0 %v163
    %1186 = vmatmul.bf16.gmra.mxu0 %v1176
    %v1187 = vpop.f32.mrf.mxu0
    %v1188 = vadd.f32 %v54, %v1187
    %v1189 = vpop.f32.mrf.mxu0
    %1190 = vdwg.mxu0
    %1191 = vmatpush.bf16.msra.mxu0 0
    %1192 = vmatpush.bf16.msra.mxu0 0
    %1193 = vmatpush.bf16.msra.mxu0 0
    %1194 = vmatpush.bf16.msra.mxu0 0
    %1195 = vmatpush.bf16.msra.mxu0 0
    %1196 = vmatpush.bf16.msra.mxu0 0
    %1197 = vmatpush.bf16.msra.mxu0 %v192
    %1198 = vmatpush.bf16.msra.mxu0 %v191
    %1199 = vmatmul.bf16.gmra.mxu0 %v1097
    %v1200 = vpop.f32.mrf.mxu0
    %v1201 = vadd.f32 0.0, %v1200
    %v1202 = vpop.f32.mrf.mxu0
    %1203 = vdwg.mxu0
    %v1204 = vadd.f32 %v1188, %v1201
    %v1205 = vxor.u32 %v1204, 2147483648
    %v1206 = vmul.f32 %v1205, 1.442695
    %v1207 = vpow.pop %v1206
    %v1208 = vadd.f32 %v1207, 1.0
    %v1209 = vrcp.pop %v1208
    %v1210 = vmul.f32 %v1208, %v1209
    %v1211 = vsub.f32 1.0, %v1210
    %v1212 = vmul.f32 %v1209, %v1211
    %v1213 = vadd.f32 %v1209, %v1212
    %vm1214 = vweird.f32 %v1208
    %vm1215 = vweird.f32 %v1209
    %vm1216 = vmor %vm1214, %vm1215
    %v1217 = vsel %vm1216, %v1209, %v1213
    %v1218 = vand.u32 2147483647, %v1208
    %vm1219 = vcmp.eq.f32.partialorder %v1218, 8.507059e+37
    %v1220 = vand.u32 %v1208, 2147483648
    %v1221 = vor.u32 1.1754944e-38, %v1220
    %v1222 = vsel %vm1219, %v1221, %v1217
    %v1223 = vmul.f32 1.0, %v1222
    %v1224 = vtanh.pop %v1204
    %v1225 = vmul.f32 %v1223, %v1068
    %1227 = vrot.lane.b32.xlu0 %v1224, 64
    %v1228 = vpop.permute.xlu0 %1227
    %v1230 = vmul.f32 %v1223, %v1228
    %1232 = vrot.lane.b32.xlu0 %v1230, 32
    %v1233 = vpop.permute.xlu0 %1232
    %v1235 = vadd.f32 %v1225, %v1233
    %v1236 = vtanh.pop %v1235
    %1238 = vrot.lane.b32.xlu0 %v1236, 64
    %v1239 = vpop.permute.xlu0 %1238
    %v1241 = vmul.f32 %v1223, %v1239
    %v1242 = vpack.c.bf16 %v1241, %v1241
    %s1243 = scalar_lea.vmem %s7, 96
    %v1244 = vld [vmem:[%s1243] sm:$0xf]
    %v1245 = vld [vmem:[%s1243 + $0x4] sm:$0xf]
    %v1246 = vld [vmem:[%s1243 + $0x8] sm:$0xf]
    %v1247 = vld [vmem:[%s1243 + $0xc] sm:$0xf]
    %1249 = vrot.lane.b32.xlu0 %v1242, 32
    %v1250 = vpop.permute.xlu0 %1249
    %v1255 = vunpack.c.l.b16 %v1244
    %v1256 = vunpack.c.l.b16 %v1245
    %v1257 = vunpack.c.l.b16 %v1246
    %v1258 = vunpack.c.l.b16 %v1247
    %v1259 = vpack.c.b16 %v1256, %v1255
    %v1260 = vpack.c.b16 %v1258, %v1257
    %v1264 = vsel %vm96, %v1250, 0
    %1266 = vmatpush.bf16.msra.mxu0 0
    %1267 = vmatpush.bf16.msra.mxu0 0
    %1268 = vmatpush.bf16.msra.mxu0 0
    %1269 = vmatpush.bf16.msra.mxu0 0
    %1270 = vmatpush.bf16.msra.mxu0 0
    %1271 = vmatpush.bf16.msra.mxu0 0
    %1272 = vmatpush.bf16.msra.mxu0 %v1260
    %1273 = vmatpush.bf16.msra.mxu0 %v1259
    %1274 = vmatmul.bf16.gmra.mxu0 %v1264
    %v1275 = vpop.f32.mrf.mxu0
    %v1276 = vadd.f32 0.0, %v1275
    %v1277 = vpop.f32.mrf.mxu0
    %1278 = vdwg.mxu0
    %v1279 = vadd.f32 %v1112, %v1276
    %1280 = vmatpush.bf16.msra.mxu0 0
    %1281 = vmatpush.bf16.msra.mxu0 0
    %1282 = vmatpush.bf16.msra.mxu0 0
    %1283 = vmatpush.bf16.msra.mxu0 0
    %1284 = vmatpush.bf16.msra.mxu0 0
    %1285 = vmatpush.bf16.msra.mxu0 0
    %1286 = vmatpush.bf16.msra.mxu0 %v93
    %1287 = vmatpush.bf16.msra.mxu0 %v92
    %1288 = vmatmul.bf16.gmra.mxu0 %v1176
    %v1289 = vpop.f32.mrf.mxu0
    %v1290 = vadd.f32 0.0, %v1289
    %v1291 = vpop.f32.mrf.mxu0
    %1292 = vdwg.mxu0
    %v1294 = vrot.slane %v1290, 2
    %v1296 = vadd.f32 %v782, %v1294
    %v1297 = vxor.u32 %v1296, 2147483648
    %v1298 = vmul.f32 %v1297, 1.442695
    %v1299 = vpow.pop %v1298
    %v1300 = vadd.f32 %v1299, 1.0
    %v1301 = vrcp.pop %v1300
    %v1302 = vmul.f32 %v1300, %v1301
    %v1303 = vsub.f32 1.0, %v1302
    %v1304 = vmul.f32 %v1301, %v1303
    %v1305 = vadd.f32 %v1301, %v1304
    %vm1306 = vweird.f32 %v1300
    %vm1307 = vweird.f32 %v1301
    %vm1308 = vmor %vm1306, %vm1307
    %v1309 = vsel %vm1308, %v1301, %v1305
    %v1310 = vand.u32 2147483647, %v1300
    %vm1311 = vcmp.eq.f32.partialorder %v1310, 8.507059e+37
    %v1312 = vand.u32 %v1300, 2147483648
    %v1313 = vor.u32 1.1754944e-38, %v1312
    %v1314 = vsel %vm1311, %v1313, %v1309
    %v1315 = vmul.f32 1.0, %v1314
    %v1316 = vtanh.pop %v1296
    %v1318 = vrot.slane %v1163, 6
    %v1320 = vmul.f32 %v1315, %v1318
    %1322 = vrot.lane.b32.xlu0 %v1316, 64
    %v1323 = vpop.permute.xlu0 %1322
    %v1325 = vmul.f32 %v1315, %v1323
    %1327 = vrot.lane.b32.xlu0 %v1325, 32
    %v1328 = vpop.permute.xlu0 %1327
    %v1330 = vadd.f32 %v1320, %v1328
    %v1331 = vtanh.pop %v1330
    %1333 = vrot.lane.b32.xlu0 %v1331, 64
    %v1334 = vpop.permute.xlu0 %1333
    %v1336 = vmul.f32 %v1315, %v1334
    %v1337 = vpack.c.bf16 %v1336, %v1336
    %v1339 = vrot.slane %v1337, 3
    %1340 = vrot.lane.b32.xlu0 %v1339, 32
    %v1341 = vpop.permute.xlu0 %1340
    %v1343 = vsel %vm96, %v1341, 0
    %1345 = vmatpush.bf16.msra.mxu0 0
    %1346 = vmatpush.bf16.msra.mxu0 0
    %1347 = vmatpush.bf16.msra.mxu0 0
    %1348 = vmatpush.bf16.msra.mxu0 0
    %1349 = vmatpush.bf16.msra.mxu0 0
    %1350 = vmatpush.bf16.msra.mxu0 0
    %1351 = vmatpush.bf16.msra.mxu0 %v164
    %1352 = vmatpush.bf16.msra.mxu0 %v163
    %1353 = vmatmul.bf16.gmra.mxu0 %v1343
    %v1354 = vpop.f32.mrf.mxu0
    %v1355 = vadd.f32 %v54, %v1354
    %v1356 = vpop.f32.mrf.mxu0
    %1357 = vdwg.mxu0
    %1358 = vmatpush.bf16.msra.mxu0 0
    %1359 = vmatpush.bf16.msra.mxu0 0
    %1360 = vmatpush.bf16.msra.mxu0 0
    %1361 = vmatpush.bf16.msra.mxu0 0
    %1362 = vmatpush.bf16.msra.mxu0 0
    %1363 = vmatpush.bf16.msra.mxu0 0
    %1364 = vmatpush.bf16.msra.mxu0 %v192
    %1365 = vmatpush.bf16.msra.mxu0 %v191
    %1366 = vmatmul.bf16.gmra.mxu0 %v1264
    %v1367 = vpop.f32.mrf.mxu0
    %v1368 = vadd.f32 0.0, %v1367
    %v1369 = vpop.f32.mrf.mxu0
    %1370 = vdwg.mxu0
    %v1371 = vadd.f32 %v1355, %v1368
    %v1372 = vxor.u32 %v1371, 2147483648
    %v1373 = vmul.f32 %v1372, 1.442695
    %v1374 = vpow.pop %v1373
    %v1375 = vadd.f32 %v1374, 1.0
    %v1376 = vrcp.pop %v1375
    %v1377 = vmul.f32 %v1375, %v1376
    %v1378 = vsub.f32 1.0, %v1377
    %v1379 = vmul.f32 %v1376, %v1378
    %v1380 = vadd.f32 %v1376, %v1379
    %vm1381 = vweird.f32 %v1375
    %vm1382 = vweird.f32 %v1376
    %vm1383 = vmor %vm1381, %vm1382
    %v1384 = vsel %vm1383, %v1376, %v1380
    %v1385 = vand.u32 2147483647, %v1375
    %vm1386 = vcmp.eq.f32.partialorder %v1385, 8.507059e+37
    %v1387 = vand.u32 %v1375, 2147483648
    %v1388 = vor.u32 1.1754944e-38, %v1387
    %v1389 = vsel %vm1386, %v1388, %v1384
    %v1390 = vmul.f32 1.0, %v1389
    %v1391 = vtanh.pop %v1371
    %v1392 = vmul.f32 %v1390, %v1235
    %1394 = vrot.lane.b32.xlu0 %v1391, 64
    %v1395 = vpop.permute.xlu0 %1394
    %v1397 = vmul.f32 %v1390, %v1395
    %1399 = vrot.lane.b32.xlu0 %v1397, 32
    %v1400 = vpop.permute.xlu0 %1399
    %v1402 = vadd.f32 %v1392, %v1400
    %v1403 = vtanh.pop %v1402
    %1405 = vrot.lane.b32.xlu0 %v1403, 64
    %v1406 = vpop.permute.xlu0 %1405
    %v1408 = vmul.f32 %v1390, %v1406
    %v1409 = vpack.c.bf16 %v1408, %v1408
    %s1410 = scalar_lea.vmem %s7, 112
    %v1411 = vld [vmem:[%s1410] sm:$0xf]
    %v1412 = vld [vmem:[%s1410 + $0x4] sm:$0xf]
    %v1413 = vld [vmem:[%s1410 + $0x8] sm:$0xf]
    %v1414 = vld [vmem:[%s1410 + $0xc] sm:$0xf]
    %1416 = vrot.lane.b32.xlu0 %v1409, 32
    %v1417 = vpop.permute.xlu0 %1416
    %v1422 = vunpack.c.l.b16 %v1411
    %v1423 = vunpack.c.l.b16 %v1412
    %v1424 = vunpack.c.l.b16 %v1413
    %v1425 = vunpack.c.l.b16 %v1414
    %v1426 = vpack.c.b16 %v1423, %v1422
    %v1427 = vpack.c.b16 %v1425, %v1424
    %v1431 = vsel %vm96, %v1417, 0
    %1433 = vmatpush.bf16.msra.mxu0 0
    %1434 = vmatpush.bf16.msra.mxu0 0
    %1435 = vmatpush.bf16.msra.mxu0 0
    %1436 = vmatpush.bf16.msra.mxu0 0
    %1437 = vmatpush.bf16.msra.mxu0 0
    %1438 = vmatpush.bf16.msra.mxu0 0
    %1439 = vmatpush.bf16.msra.mxu0 %v1427
    %1440 = vmatpush.bf16.msra.mxu0 %v1426
    %1441 = vmatmul.bf16.gmra.mxu0 %v1431
    %v1442 = vpop.f32.mrf.mxu0
    %v1443 = vadd.f32 0.0, %v1442
    %v1444 = vpop.f32.mrf.mxu0
    %1445 = vdwg.mxu0
    %v1446 = vadd.f32 %v1279, %v1443
    %v1447 = vld [vmem:[%s8] sm:$0x1]
    %v1449 = vperm.slane %v1447, 0
    %v1451 = vadd.f32 %v1446, %v1449
    %vm1452 = vcmask 74752
    %1453 = vst.msk [vmem:[#allocation2] sm:$0x3] %vm1452, %v1451
    // Predicated region
    $region38: #{lstm_model.1} parent=1 // pred_check
      _
    $region39: #{lstm_model.1} parent=1 // pred_check_branch
      %1455 = sbr.rel (0) target = $region41
    $region40: #{lstm_model.1} parent=1 // pred_region
      %1457 = vsyncadd [#allocation3], 0
      %s1459 = sshll.u32 [#allocation2], 4
      %s1460 = int_to_ptr.vmem [resolvable:$true] %s1459
      %s1461 = sshll.u32 %s9, 4
      %s1462 = int_to_ptr.hbm [resolvable:$true] %s1461
      %1464 = dma.vmem_to_hbm [thread:$0]  %s1460, 32, %s1462, [#allocation3]
    $region41: #{lstm_model.1} parent=1 // pred_fallthru
      _
    // Predicated region
    $region42: #{lstm_model.1} parent=1 // pred_check
      _
    $region43: #{lstm_model.1} parent=1 // pred_check_branch
      %1466 = sbr.rel (0) target = $region45
    $region44: #{lstm_model.1} parent=1 // pred_region
      %1468 = dma.done [#allocation3], 32
    $region45: #{lstm_model.1} parent=1 // pred_fallthru
      _
    %1469 = vsyncpa [#allocation3], 1

</llo_original>
